<compile_context>
chip_gen: v7x
topology: tpu7x:2x2x1
jax: 0.10.0
libtpu: 0.0.40
codegen_flags: <defaults>
</compile_context>

<pallas_src>
import jax
import jax.numpy as jnp
from jax.experimental import pallas as pl
from jax.experimental.pallas import tpu as pltpu


# ----------------------------- "config" --------------------------------------
class config:
    vocab_size = 20
    embedding_dim = 16
    hidden_size = 32
    num_layers = 1          # single-layer GRU implemented in the kernel

    class Num2Sequence:
        PAD = 0.0


# ----------------------------- Pallas kernel ---------------------------------
def _encoder_gru_kernel(ints_ref, params_ref, out_ref):
    """Embedding + full GRU recurrence, single invocation, no grid.

    ints_ref  : (T*Bp + Bp, 1) int32
                  rows [0, T*Bp)      time-major flattened token ids
                  rows [T*Bp, T*Bp+Bp) per-row sequence lengths (0 for padding)
    params_ref: (3, R, H) f32, R = Vp + H + 8, per-gate slab (see header).
                  Gate order (r, z, n); r/z slabs are pre-scaled by 0.5.
    out_ref   : (Bp, T*H + H) f32   lane-dense output slab; last H lanes hold
                  the final hidden state.
    """
    Bp = out_ref.shape[0]
    H = params_ref.shape[-1]
    R = params_ref.shape[1]
    Vp = R - H - 8                       # padded vocab size (layout invariant)
    T = out_ref.shape[1] // H - 1
    TB = T * Bp

    ids_tm = ints_ref[0:TB, :]           # (T*Bp, 1) int32, time-major
    lens = ints_ref[TB:TB + Bp, :]       # (Bp, 1)   int32

    # ---- embedding (folded into gate tables) as a one-hot MXU matmul --------
    vocab_iota = jax.lax.broadcasted_iota(jnp.int32, (TB, Vp), 1)
    onehot = (ids_tm == vocab_iota).astype(jnp.float32)            # (T*Bp, Vp)

    p_r = params_ref[0]                  # (R, H) packed slab per gate
    p_z = params_ref[1]
    p_n = params_ref[2]

    # Input-path gate pre-activations for ALL timesteps (off the serialized
    # critical path).  r/z are already half-scaled (sigmoid-via-tanh).
    gi_r = jnp.dot(onehot, p_r[:Vp],
                   preferred_element_type=jnp.float32) + p_r[Vp + H:Vp + H + 1]
    gi_z = jnp.dot(onehot, p_z[:Vp],
                   preferred_element_type=jnp.float32) + p_z[Vp + H:Vp + H + 1]
    gi_n = jnp.dot(onehot, p_n[:Vp],
                   preferred_element_type=jnp.float32) + p_n[Vp + H:Vp + H + 1]

    wh_r = p_r[Vp:Vp + H]                # (H, H) each; r/z pre-scaled by 0.5
    wh_z = p_z[Vp:Vp + H]
    wh_n = p_n[Vp:Vp + H]
    b_hn = p_n[Vp + H + 1:Vp + H + 2]    # (1, H), stays on the r-gated h-path

    # Mask broadcast hoisted out of the unrolled loop (no CSE of broadcasts).
    lens_b = jnp.broadcast_to(lens, (Bp, H))                        # (Bp, H)

    h = jnp.zeros((Bp, H), jnp.float32)
    # T is tiny and static -> fully unrolled; only the h-dependent dots sit on
    # the recurrence critical path.
    for t in range(T):
        rt = t * Bp                      # sublane-aligned row offset into gi_*
        ct = t * H                       # lane offset into the output slab
        a_r = jnp.dot(h, wh_r, preferred_element_type=jnp.float32)
        a_z = jnp.dot(h, wh_z, preferred_element_type=jnp.float32)
        a_n = jnp.dot(h, wh_n, preferred_element_type=jnp.float32) + b_hn
        # sigmoid(x) = 0.5*tanh(0.5*x) + 0.5 ; the 0.5*x is folded into params.
        r = jnp.tanh(gi_r[rt:rt + Bp] + a_r) * 0.5 + 0.5
        z = jnp.tanh(gi_z[rt:rt + Bp] + a_z) * 0.5 + 0.5
        n = jnp.tanh(gi_n[rt:rt + Bp] + r * a_n)
        h_new = n + z * (h - n)
        m = t < lens_b                   # (Bp, H) bool, t is static
        h = jnp.where(m, h_new, h)       # freeze past the sequence length
        # per-step static-offset store (vst slot, hides under MXU/EUP latency)
        out_ref[:, ct:ct + H] = jnp.where(m, h_new, 0.0)   # PAD(=0) past length

    out_ref[:, T * H:T * H + H] = h      # final hidden appended to the slab


# ----------------------------- jitted wrapper ---------------------------------
@jax.jit
def _encoder_forward(params, input_ids, lengths):
    B, T = input_ids.shape
    H = params.shape[-1]
    Bp = ((B + 7) // 8) * 8              # pad batch to the f32 sublane tile
    pad = Bp - B

    ids_p = jnp.pad(input_ids.astype(jnp.int32), ((0, pad), (0, 0)))
    lens_p = jnp.pad(lengths.astype(jnp.int32), (0, pad))   # padded rows: len 0
    ids_tm = jnp.transpose(ids_p, (1, 0)).reshape(T * Bp, 1)  # time-major, flat
    ints = jnp.concatenate([ids_tm, lens_p.reshape(Bp, 1)], axis=0)

    out = pl.pallas_call(
        _encoder_gru_kernel,
        out_shape=jax.ShapeDtypeStruct((Bp, T * H + H), jnp.float32),
        in_specs=[pl.BlockSpec(memory_space=pltpu.MemorySpace.VMEM),
                  pl.BlockSpec(memory_space=pltpu.MemorySpace.VMEM)],
        out_specs=pl.BlockSpec(memory_space=pltpu.MemorySpace.VMEM),
    )(ints, params)

    output_padded = out[:B, :T * H].reshape(B, T, H)   # lane-dense slab -> (B,T,H)
    hidden = out[:B, T * H:][None, :, :]               # (num_layers=1, B, H)
    return output_padded, hidden


# ----------------------------- Encoder wrapper --------------------------------
class Encoder:
    """JAX/Pallas port of U-A2A/encoderGRU.py::Encoder (embedding + 1-layer GRU,
    batch_first, pack_padded/pad_packed semantics with PAD padding value)."""

    def __init__(self, key):
        V, E, H = config.vocab_size, config.embedding_dim, config.hidden_size
        k_emb, k1, k2, k3, k4 = jax.random.split(key, 5)
        bound = 1.0 / jnp.sqrt(jnp.float32(H))
        # nn.Embedding default init ~ N(0,1); nn.GRU default ~ U(-1/sqrt(H), 1/sqrt(H))
        self.emb = jax.random.normal(k_emb, (V, E), jnp.float32)
        self.w_ih = jax.random.uniform(k1, (3 * H, E), jnp.float32, -bound, bound)
        self.w_hh = jax.random.uniform(k2, (3 * H, H), jnp.float32, -bound, bound)
        self.b_ih = jax.random.uniform(k3, (3 * H,), jnp.float32, -bound, bound)
        self.b_hh = jax.random.uniform(k4, (3 * H,), jnp.float32, -bound, bound)

        # ---- single packed, kernel-friendly parameter buffer (built once) ----
        Vp = ((V + 7) // 8) * 8
        R = Vp + H + 8                                   # table | Whh^T | biases
        emb_pad = jnp.pad(self.emb, ((0, Vp - V), (0, 0)))          # (Vp, E)

        params = jnp.zeros((3, R, H), jnp.float32)       # gate order (r, z, n)
        for g in range(3):
            w_ih_g = self.w_ih[g * H:(g + 1) * H]        # (H, E)
            w_hh_g = self.w_hh[g * H:(g + 1) * H]        # (H, H)
            # embedding folded into the input projection
            table_g = jnp.dot(emb_pad, w_ih_g.T,
                              precision=jax.lax.Precision.HIGHEST)  # (Vp, H)
            if g < 2:   # r, z: fuse both biases, pre-scale by 0.5 (tanh sigmoid)
                bias_g = self.b_ih[g * H:(g + 1) * H] + self.b_hh[g * H:(g + 1) * H]
                scale = 0.5
            else:       # n: input bias only; b_hn stays on the r-gated h-path
                bias_g = self.b_ih[g * H:(g + 1) * H]
                scale = 1.0
            params = params.at[g, :Vp, :].set(scale * table_g)
            params = params.at[g, Vp:Vp + H, :].set(scale * w_hh_g.T)
            params = params.at[g, Vp + H, :].set(scale * bias_g)
        params = params.at[2, Vp + H + 1, :].set(self.b_hh[2 * H:])
        self.params = params

    def __call__(self, input_ids, input_length):
        # input_ids: (B, T) int32 token ids; input_length: (B,) ints, sorted desc.
        ids = jnp.asarray(input_ids, jnp.int32)
        lengths = jnp.asarray(input_length, jnp.int32)
        return _encoder_forward(self.params, ids, lengths)


# ----------------------------- pure-JAX reference ------------------------------
def _reference(enc, input_ids, input_length):
    B, T = input_ids.shape
    H = config.hidden_size
    x = jnp.take(enc.emb, input_ids, axis=0)
    lengths = jnp.asarray(input_length, jnp.int32)
    h = jnp.zeros((B, H), jnp.float32)
    outs = []
    for t in range(T):
        xt = x[:, t, :]
        gi = xt @ enc.w_ih.T + enc.b_ih
        gh = h @ enc.w_hh.T + enc.b_hh
        r = jax.nn.sigmoid(gi[:, :H] + gh[:, :H])
        z = jax.nn.sigmoid(gi[:, H:2 * H] + gh[:, H:2 * H])
        n = jnp.tanh(gi[:, 2 * H:] + r * gh[:, 2 * H:])
        h_new = (1 - z) * n + z * h
        m = (t < lengths).astype(jnp.float32)[:, None]
        h = m * h_new + (1 - m) * h
        outs.append(m * h_new)
    return jnp.stack(outs, axis=1), h[None]


if __name__ == "__main__":
    key = jax.random.PRNGKey(0)
    k_params, k_ids = jax.random.split(key)

    B, T = 4, 8
    encoder = Encoder(k_params)

    input_ids = jax.random.randint(k_ids, (B, T), 1, config.vocab_size, jnp.int32)
    # pack_padded_sequence requires lengths sorted in decreasing order.
    input_length = jnp.array([8, 7, 5, 3], jnp.int32)
    # zero-out padded token positions (as a dataloader would with PAD idx 0)
    pad_mask = jnp.arange(T)[None, :] < input_length[:, None]
    input_ids = jnp.where(pad_mask, input_ids, 0)

    output_padded, hidden = encoder(input_ids, input_length)
    jax.block_until_ready((output_padded, hidden))

    assert output_padded.shape == (B, T, config.hidden_size)
    assert hidden.shape == (config.num_layers, B, config.hidden_size)

    ref_out, ref_hid = _reference(encoder, input_ids, input_length)
    assert jnp.allclose(output_padded, ref_out, atol=1e-4), "output mismatch"
    assert jnp.allclose(hidden, ref_hid, atol=1e-4), "hidden mismatch"

    print("KERNEL_OK")
</pallas_src>

<mosaic_0001>
module attributes {stable_mosaic.version = 11 : i64} {
  func.func @_encoder_gru_kernel(%arg0: memref<72x1xi32, #tpu.memory_space<vmem>>, %arg1: memref<3x64x32xf32, #tpu.memory_space<vmem>>, %arg2: memref<8x288xf32, #tpu.memory_space<vmem>>) attributes {dimension_semantics = [], scalar_prefetch = 0 : i64, scratch_operands = 0 : i64, tpu.core_type = #tpu.core_type<tc>} {
    %c0 = arith.constant 0 : index
    %c0_0 = arith.constant 0 : index
    %0 = vector.load %arg0[%c0, %c0_0] : memref<72x1xi32, #tpu.memory_space<vmem>>, vector<64x1xi32>
    %c64 = arith.constant 64 : index
    %c0_1 = arith.constant 0 : index
    %1 = vector.load %arg0[%c64, %c0_1] : memref<72x1xi32, #tpu.memory_space<vmem>>, vector<8x1xi32>
    %2 = tpu.iota {dimensions = array<i32: 1>} : vector<64x24xi32>
    %3 = vector.broadcast %0 : vector<64x1xi32> to vector<64x24xi32>
    %4 = arith.cmpi eq, %3, %2 : vector<64x24xi32>
    %5 = arith.extui %4 : vector<64x24xi1> to vector<64x24xi32>
    %6 = arith.sitofp %5 : vector<64x24xi32> to vector<64x24xf32>
    %c0_2 = arith.constant 0 : index
    %c0_3 = arith.constant 0 : index
    %c0_4 = arith.constant 0 : index
    %7 = vector.load %arg1[%c0_2, %c0_3, %c0_4] : memref<3x64x32xf32, #tpu.memory_space<vmem>>, vector<1x64x32xf32>
    %8 = vector.shape_cast %7 : vector<1x64x32xf32> to vector<64x32xf32>
    %c1 = arith.constant 1 : index
    %c0_5 = arith.constant 0 : index
    %c0_6 = arith.constant 0 : index
    %9 = vector.load %arg1[%c1, %c0_5, %c0_6] : memref<3x64x32xf32, #tpu.memory_space<vmem>>, vector<1x64x32xf32>
    %10 = vector.shape_cast %9 : vector<1x64x32xf32> to vector<64x32xf32>
    %c2 = arith.constant 2 : index
    %c0_7 = arith.constant 0 : index
    %c0_8 = arith.constant 0 : index
    %11 = vector.load %arg1[%c2, %c0_7, %c0_8] : memref<3x64x32xf32, #tpu.memory_space<vmem>>, vector<1x64x32xf32>
    %12 = vector.shape_cast %11 : vector<1x64x32xf32> to vector<64x32xf32>
    %13 = vector.extract_strided_slice %8 {offsets = [0, 0], sizes = [24, 32], strides = [1, 1]} : vector<64x32xf32> to vector<24x32xf32>
    %cst = arith.constant dense<0.000000e+00> : vector<64x32xf32>
    %14 = tpu.matmul %6, %13, %cst {dimension_numbers = #tpu.dot_dimension_numbers<[1], [0], [0], [1], [0, 0, 1, 1], [], []>} : vector<64x24xf32>, vector<24x32xf32>, vector<64x32xf32> -> vector<64x32xf32>
    %15 = vector.extract_strided_slice %8 {offsets = [56, 0], sizes = [1, 32], strides = [1, 1]} : vector<64x32xf32> to vector<1x32xf32>
    %16 = vector.broadcast %15 : vector<1x32xf32> to vector<64x32xf32>
    %17 = arith.addf %14, %16 : vector<64x32xf32>
    %18 = vector.extract_strided_slice %10 {offsets = [0, 0], sizes = [24, 32], strides = [1, 1]} : vector<64x32xf32> to vector<24x32xf32>
    %cst_9 = arith.constant dense<0.000000e+00> : vector<64x32xf32>
    %19 = tpu.matmul %6, %18, %cst_9 {dimension_numbers = #tpu.dot_dimension_numbers<[1], [0], [0], [1], [0, 0, 1, 1], [], []>} : vector<64x24xf32>, vector<24x32xf32>, vector<64x32xf32> -> vector<64x32xf32>
    %20 = vector.extract_strided_slice %10 {offsets = [56, 0], sizes = [1, 32], strides = [1, 1]} : vector<64x32xf32> to vector<1x32xf32>
    %21 = vector.broadcast %20 : vector<1x32xf32> to vector<64x32xf32>
    %22 = arith.addf %19, %21 : vector<64x32xf32>
    %23 = vector.extract_strided_slice %12 {offsets = [0, 0], sizes = [24, 32], strides = [1, 1]} : vector<64x32xf32> to vector<24x32xf32>
    %cst_10 = arith.constant dense<0.000000e+00> : vector<64x32xf32>
    %24 = tpu.matmul %6, %23, %cst_10 {dimension_numbers = #tpu.dot_dimension_numbers<[1], [0], [0], [1], [0, 0, 1, 1], [], []>} : vector<64x24xf32>, vector<24x32xf32>, vector<64x32xf32> -> vector<64x32xf32>
    %25 = vector.extract_strided_slice %12 {offsets = [56, 0], sizes = [1, 32], strides = [1, 1]} : vector<64x32xf32> to vector<1x32xf32>
    %26 = vector.broadcast %25 : vector<1x32xf32> to vector<64x32xf32>
    %27 = arith.addf %24, %26 : vector<64x32xf32>
    %28 = vector.extract_strided_slice %8 {offsets = [24, 0], sizes = [32, 32], strides = [1, 1]} : vector<64x32xf32> to vector<32x32xf32>
    %29 = vector.extract_strided_slice %10 {offsets = [24, 0], sizes = [32, 32], strides = [1, 1]} : vector<64x32xf32> to vector<32x32xf32>
    %30 = vector.extract_strided_slice %12 {offsets = [24, 0], sizes = [32, 32], strides = [1, 1]} : vector<64x32xf32> to vector<32x32xf32>
    %31 = vector.extract_strided_slice %12 {offsets = [57, 0], sizes = [1, 32], strides = [1, 1]} : vector<64x32xf32> to vector<1x32xf32>
    %32 = vector.shape_cast %1 : vector<8x1xi32> to vector<8x1xi32>
    %33 = vector.broadcast %32 : vector<8x1xi32> to vector<8x32xi32>
    %cst_11 = arith.constant 0.000000e+00 : f32
    %34 = vector.broadcast %cst_11 : f32 to vector<8x32xf32>
    %cst_12 = arith.constant dense<0.000000e+00> : vector<8x32xf32>
    %35 = tpu.matmul %34, %28, %cst_12 {dimension_numbers = #tpu.dot_dimension_numbers<[1], [0], [0], [1], [0, 0, 1, 1], [], []>} : vector<8x32xf32>, vector<32x32xf32>, vector<8x32xf32> -> vector<8x32xf32>
    %cst_13 = arith.constant dense<0.000000e+00> : vector<8x32xf32>
    %36 = tpu.matmul %34, %29, %cst_13 {dimension_numbers = #tpu.dot_dimension_numbers<[1], [0], [0], [1], [0, 0, 1, 1], [], []>} : vector<8x32xf32>, vector<32x32xf32>, vector<8x32xf32> -> vector<8x32xf32>
    %cst_14 = arith.constant dense<0.000000e+00> : vector<8x32xf32>
    %37 = tpu.matmul %34, %30, %cst_14 {dimension_numbers = #tpu.dot_dimension_numbers<[1], [0], [0], [1], [0, 0, 1, 1], [], []>} : vector<8x32xf32>, vector<32x32xf32>, vector<8x32xf32> -> vector<8x32xf32>
    %38 = vector.broadcast %31 : vector<1x32xf32> to vector<8x32xf32>
    %39 = arith.addf %37, %38 : vector<8x32xf32>
    %40 = vector.extract_strided_slice %17 {offsets = [0, 0], sizes = [8, 32], strides = [1, 1]} : vector<64x32xf32> to vector<8x32xf32>
    %41 = arith.addf %40, %35 : vector<8x32xf32>
    %42 = math.tanh %41 : vector<8x32xf32>
    %cst_15 = arith.constant 5.000000e-01 : f32
    %43 = vector.broadcast %cst_15 : f32 to vector<8x32xf32>
    %44 = arith.mulf %42, %43 : vector<8x32xf32>
    %cst_16 = arith.constant 5.000000e-01 : f32
    %45 = vector.broadcast %cst_16 : f32 to vector<8x32xf32>
    %46 = arith.addf %44, %45 : vector<8x32xf32>
    %47 = vector.extract_strided_slice %22 {offsets = [0, 0], sizes = [8, 32], strides = [1, 1]} : vector<64x32xf32> to vector<8x32xf32>
    %48 = arith.addf %47, %36 : vector<8x32xf32>
    %49 = math.tanh %48 : vector<8x32xf32>
    %cst_17 = arith.constant 5.000000e-01 : f32
    %50 = vector.broadcast %cst_17 : f32 to vector<8x32xf32>
    %51 = arith.mulf %49, %50 : vector<8x32xf32>
    %cst_18 = arith.constant 5.000000e-01 : f32
    %52 = vector.broadcast %cst_18 : f32 to vector<8x32xf32>
    %53 = arith.addf %51, %52 : vector<8x32xf32>
    %54 = vector.extract_strided_slice %27 {offsets = [0, 0], sizes = [8, 32], strides = [1, 1]} : vector<64x32xf32> to vector<8x32xf32>
    %55 = arith.mulf %46, %39 : vector<8x32xf32>
    %56 = arith.addf %54, %55 : vector<8x32xf32>
    %57 = math.tanh %56 : vector<8x32xf32>
    %58 = arith.subf %34, %57 : vector<8x32xf32>
    %59 = arith.mulf %53, %58 : vector<8x32xf32>
    %60 = arith.addf %57, %59 : vector<8x32xf32>
    %c0_i32 = arith.constant 0 : i32
    %61 = vector.broadcast %c0_i32 : i32 to vector<8x32xi32>
    %62 = arith.cmpi sgt, %33, %61 : vector<8x32xi32>
    %63 = arith.select %62, %60, %34 : vector<8x32xi1>, vector<8x32xf32>
    %cst_19 = arith.constant 0.000000e+00 : f32
    %64 = vector.broadcast %cst_19 : f32 to vector<8x32xf32>
    %65 = arith.select %62, %60, %64 : vector<8x32xi1>, vector<8x32xf32>
    %c0_20 = arith.constant 0 : index
    %c0_21 = arith.constant 0 : index
    %66 = vector.load %arg2[%c0_20, %c0_21] : memref<8x288xf32, #tpu.memory_space<vmem>>, vector<8x32xf32>
    tpu.vector_store %arg2[%c0_20, %c0_21], %65 {strides = array<i32>} : memref<8x288xf32, #tpu.memory_space<vmem>>, vector<8x32xf32>,
    %cst_22 = arith.constant dense<0.000000e+00> : vector<8x32xf32>
    %67 = tpu.matmul %63, %28, %cst_22 {dimension_numbers = #tpu.dot_dimension_numbers<[1], [0], [0], [1], [0, 0, 1, 1], [], []>} : vector<8x32xf32>, vector<32x32xf32>, vector<8x32xf32> -> vector<8x32xf32>
    %cst_23 = arith.constant dense<0.000000e+00> : vector<8x32xf32>
    %68 = tpu.matmul %63, %29, %cst_23 {dimension_numbers = #tpu.dot_dimension_numbers<[1], [0], [0], [1], [0, 0, 1, 1], [], []>} : vector<8x32xf32>, vector<32x32xf32>, vector<8x32xf32> -> vector<8x32xf32>
    %cst_24 = arith.constant dense<0.000000e+00> : vector<8x32xf32>
    %69 = tpu.matmul %63, %30, %cst_24 {dimension_numbers = #tpu.dot_dimension_numbers<[1], [0], [0], [1], [0, 0, 1, 1], [], []>} : vector<8x32xf32>, vector<32x32xf32>, vector<8x32xf32> -> vector<8x32xf32>
    %70 = vector.broadcast %31 : vector<1x32xf32> to vector<8x32xf32>
    %71 = arith.addf %69, %70 : vector<8x32xf32>
    %72 = vector.extract_strided_slice %17 {offsets = [8, 0], sizes = [8, 32], strides = [1, 1]} : vector<64x32xf32> to vector<8x32xf32>
    %73 = arith.addf %72, %67 : vector<8x32xf32>
    %74 = math.tanh %73 : vector<8x32xf32>
    %cst_25 = arith.constant 5.000000e-01 : f32
    %75 = vector.broadcast %cst_25 : f32 to vector<8x32xf32>
    %76 = arith.mulf %74, %75 : vector<8x32xf32>
    %cst_26 = arith.constant 5.000000e-01 : f32
    %77 = vector.broadcast %cst_26 : f32 to vector<8x32xf32>
    %78 = arith.addf %76, %77 : vector<8x32xf32>
    %79 = vector.extract_strided_slice %22 {offsets = [8, 0], sizes = [8, 32], strides = [1, 1]} : vector<64x32xf32> to vector<8x32xf32>
    %80 = arith.addf %79, %68 : vector<8x32xf32>
    %81 = math.tanh %80 : vector<8x32xf32>
    %cst_27 = arith.constant 5.000000e-01 : f32
    %82 = vector.broadcast %cst_27 : f32 to vector<8x32xf32>
    %83 = arith.mulf %81, %82 : vector<8x32xf32>
    %cst_28 = arith.constant 5.000000e-01 : f32
    %84 = vector.broadcast %cst_28 : f32 to vector<8x32xf32>
    %85 = arith.addf %83, %84 : vector<8x32xf32>
    %86 = vector.extract_strided_slice %27 {offsets = [8, 0], sizes = [8, 32], strides = [1, 1]} : vector<64x32xf32> to vector<8x32xf32>
    %87 = arith.mulf %78, %71 : vector<8x32xf32>
    %88 = arith.addf %86, %87 : vector<8x32xf32>
    %89 = math.tanh %88 : vector<8x32xf32>
    %90 = arith.subf %63, %89 : vector<8x32xf32>
    %91 = arith.mulf %85, %90 : vector<8x32xf32>
    %92 = arith.addf %89, %91 : vector<8x32xf32>
    %c1_i32 = arith.constant 1 : i32
    %93 = vector.broadcast %c1_i32 : i32 to vector<8x32xi32>
    %94 = arith.cmpi sgt, %33, %93 : vector<8x32xi32>
    %95 = arith.select %94, %92, %63 : vector<8x32xi1>, vector<8x32xf32>
    %cst_29 = arith.constant 0.000000e+00 : f32
    %96 = vector.broadcast %cst_29 : f32 to vector<8x32xf32>
    %97 = arith.select %94, %92, %96 : vector<8x32xi1>, vector<8x32xf32>
    %c0_30 = arith.constant 0 : index
    %c32 = arith.constant 32 : index
    %98 = vector.load %arg2[%c0_30, %c32] : memref<8x288xf32, #tpu.memory_space<vmem>>, vector<8x32xf32>
    tpu.vector_store %arg2[%c0_30, %c32], %97 {strides = array<i32>} : memref<8x288xf32, #tpu.memory_space<vmem>>, vector<8x32xf32>,
    %cst_31 = arith.constant dense<0.000000e+00> : vector<8x32xf32>
    %99 = tpu.matmul %95, %28, %cst_31 {dimension_numbers = #tpu.dot_dimension_numbers<[1], [0], [0], [1], [0, 0, 1, 1], [], []>} : vector<8x32xf32>, vector<32x32xf32>, vector<8x32xf32> -> vector<8x32xf32>
    %cst_32 = arith.constant dense<0.000000e+00> : vector<8x32xf32>
    %100 = tpu.matmul %95, %29, %cst_32 {dimension_numbers = #tpu.dot_dimension_numbers<[1], [0], [0], [1], [0, 0, 1, 1], [], []>} : vector<8x32xf32>, vector<32x32xf32>, vector<8x32xf32> -> vector<8x32xf32>
    %cst_33 = arith.constant dense<0.000000e+00> : vector<8x32xf32>
    %101 = tpu.matmul %95, %30, %cst_33 {dimension_numbers = #tpu.dot_dimension_numbers<[1], [0], [0], [1], [0, 0, 1, 1], [], []>} : vector<8x32xf32>, vector<32x32xf32>, vector<8x32xf32> -> vector<8x32xf32>
    %102 = vector.broadcast %31 : vector<1x32xf32> to vector<8x32xf32>
    %103 = arith.addf %101, %102 : vector<8x32xf32>
    %104 = vector.extract_strided_slice %17 {offsets = [16, 0], sizes = [8, 32], strides = [1, 1]} : vector<64x32xf32> to vector<8x32xf32>
    %105 = arith.addf %104, %99 : vector<8x32xf32>
    %106 = math.tanh %105 : vector<8x32xf32>
    %cst_34 = arith.constant 5.000000e-01 : f32
    %107 = vector.broadcast %cst_34 : f32 to vector<8x32xf32>
    %108 = arith.mulf %106, %107 : vector<8x32xf32>
    %cst_35 = arith.constant 5.000000e-01 : f32
    %109 = vector.broadcast %cst_35 : f32 to vector<8x32xf32>
    %110 = arith.addf %108, %109 : vector<8x32xf32>
    %111 = vector.extract_strided_slice %22 {offsets = [16, 0], sizes = [8, 32], strides = [1, 1]} : vector<64x32xf32> to vector<8x32xf32>
    %112 = arith.addf %111, %100 : vector<8x32xf32>
    %113 = math.tanh %112 : vector<8x32xf32>
    %cst_36 = arith.constant 5.000000e-01 : f32
    %114 = vector.broadcast %cst_36 : f32 to vector<8x32xf32>
    %115 = arith.mulf %113, %114 : vector<8x32xf32>
    %cst_37 = arith.constant 5.000000e-01 : f32
    %116 = vector.broadcast %cst_37 : f32 to vector<8x32xf32>
    %117 = arith.addf %115, %116 : vector<8x32xf32>
    %118 = vector.extract_strided_slice %27 {offsets = [16, 0], sizes = [8, 32], strides = [1, 1]} : vector<64x32xf32> to vector<8x32xf32>
    %119 = arith.mulf %110, %103 : vector<8x32xf32>
    %120 = arith.addf %118, %119 : vector<8x32xf32>
    %121 = math.tanh %120 : vector<8x32xf32>
    %122 = arith.subf %95, %121 : vector<8x32xf32>
    %123 = arith.mulf %117, %122 : vector<8x32xf32>
    %124 = arith.addf %121, %123 : vector<8x32xf32>
    %c2_i32 = arith.constant 2 : i32
    %125 = vector.broadcast %c2_i32 : i32 to vector<8x32xi32>
    %126 = arith.cmpi sgt, %33, %125 : vector<8x32xi32>
    %127 = arith.select %126, %124, %95 : vector<8x32xi1>, vector<8x32xf32>
    %cst_38 = arith.constant 0.000000e+00 : f32
    %128 = vector.broadcast %cst_38 : f32 to vector<8x32xf32>
    %129 = arith.select %126, %124, %128 : vector<8x32xi1>, vector<8x32xf32>
    %c0_39 = arith.constant 0 : index
    %c64_40 = arith.constant 64 : index
    %130 = vector.load %arg2[%c0_39, %c64_40] : memref<8x288xf32, #tpu.memory_space<vmem>>, vector<8x32xf32>
    tpu.vector_store %arg2[%c0_39, %c64_40], %129 {strides = array<i32>} : memref<8x288xf32, #tpu.memory_space<vmem>>, vector<8x32xf32>,
    %cst_41 = arith.constant dense<0.000000e+00> : vector<8x32xf32>
    %131 = tpu.matmul %127, %28, %cst_41 {dimension_numbers = #tpu.dot_dimension_numbers<[1], [0], [0], [1], [0, 0, 1, 1], [], []>} : vector<8x32xf32>, vector<32x32xf32>, vector<8x32xf32> -> vector<8x32xf32>
    %cst_42 = arith.constant dense<0.000000e+00> : vector<8x32xf32>
    %132 = tpu.matmul %127, %29, %cst_42 {dimension_numbers = #tpu.dot_dimension_numbers<[1], [0], [0], [1], [0, 0, 1, 1], [], []>} : vector<8x32xf32>, vector<32x32xf32>, vector<8x32xf32> -> vector<8x32xf32>
    %cst_43 = arith.constant dense<0.000000e+00> : vector<8x32xf32>
    %133 = tpu.matmul %127, %30, %cst_43 {dimension_numbers = #tpu.dot_dimension_numbers<[1], [0], [0], [1], [0, 0, 1, 1], [], []>} : vector<8x32xf32>, vector<32x32xf32>, vector<8x32xf32> -> vector<8x32xf32>
    %134 = vector.broadcast %31 : vector<1x32xf32> to vector<8x32xf32>
    %135 = arith.addf %133, %134 : vector<8x32xf32>
    %136 = vector.extract_strided_slice %17 {offsets = [24, 0], sizes = [8, 32], strides = [1, 1]} : vector<64x32xf32> to vector<8x32xf32>
    %137 = arith.addf %136, %131 : vector<8x32xf32>
    %138 = math.tanh %137 : vector<8x32xf32>
    %cst_44 = arith.constant 5.000000e-01 : f32
    %139 = vector.broadcast %cst_44 : f32 to vector<8x32xf32>
    %140 = arith.mulf %138, %139 : vector<8x32xf32>
    %cst_45 = arith.constant 5.000000e-01 : f32
    %141 = vector.broadcast %cst_45 : f32 to vector<8x32xf32>
    %142 = arith.addf %140, %141 : vector<8x32xf32>
    %143 = vector.extract_strided_slice %22 {offsets = [24, 0], sizes = [8, 32], strides = [1, 1]} : vector<64x32xf32> to vector<8x32xf32>
    %144 = arith.addf %143, %132 : vector<8x32xf32>
    %145 = math.tanh %144 : vector<8x32xf32>
    %cst_46 = arith.constant 5.000000e-01 : f32
    %146 = vector.broadcast %cst_46 : f32 to vector<8x32xf32>
    %147 = arith.mulf %145, %146 : vector<8x32xf32>
    %cst_47 = arith.constant 5.000000e-01 : f32
    %148 = vector.broadcast %cst_47 : f32 to vector<8x32xf32>
    %149 = arith.addf %147, %148 : vector<8x32xf32>
    %150 = vector.extract_strided_slice %27 {offsets = [24, 0], sizes = [8, 32], strides = [1, 1]} : vector<64x32xf32> to vector<8x32xf32>
    %151 = arith.mulf %142, %135 : vector<8x32xf32>
    %152 = arith.addf %150, %151 : vector<8x32xf32>
    %153 = math.tanh %152 : vector<8x32xf32>
    %154 = arith.subf %127, %153 : vector<8x32xf32>
    %155 = arith.mulf %149, %154 : vector<8x32xf32>
    %156 = arith.addf %153, %155 : vector<8x32xf32>
    %c3_i32 = arith.constant 3 : i32
    %157 = vector.broadcast %c3_i32 : i32 to vector<8x32xi32>
    %158 = arith.cmpi sgt, %33, %157 : vector<8x32xi32>
    %159 = arith.select %158, %156, %127 : vector<8x32xi1>, vector<8x32xf32>
    %cst_48 = arith.constant 0.000000e+00 : f32
    %160 = vector.broadcast %cst_48 : f32 to vector<8x32xf32>
    %161 = arith.select %158, %156, %160 : vector<8x32xi1>, vector<8x32xf32>
    %c0_49 = arith.constant 0 : index
    %c96 = arith.constant 96 : index
    %162 = vector.load %arg2[%c0_49, %c96] : memref<8x288xf32, #tpu.memory_space<vmem>>, vector<8x32xf32>
    tpu.vector_store %arg2[%c0_49, %c96], %161 {strides = array<i32>} : memref<8x288xf32, #tpu.memory_space<vmem>>, vector<8x32xf32>,
    %cst_50 = arith.constant dense<0.000000e+00> : vector<8x32xf32>
    %163 = tpu.matmul %159, %28, %cst_50 {dimension_numbers = #tpu.dot_dimension_numbers<[1], [0], [0], [1], [0, 0, 1, 1], [], []>} : vector<8x32xf32>, vector<32x32xf32>, vector<8x32xf32> -> vector<8x32xf32>
    %cst_51 = arith.constant dense<0.000000e+00> : vector<8x32xf32>
    %164 = tpu.matmul %159, %29, %cst_51 {dimension_numbers = #tpu.dot_dimension_numbers<[1], [0], [0], [1], [0, 0, 1, 1], [], []>} : vector<8x32xf32>, vector<32x32xf32>, vector<8x32xf32> -> vector<8x32xf32>
    %cst_52 = arith.constant dense<0.000000e+00> : vector<8x32xf32>
    %165 = tpu.matmul %159, %30, %cst_52 {dimension_numbers = #tpu.dot_dimension_numbers<[1], [0], [0], [1], [0, 0, 1, 1], [], []>} : vector<8x32xf32>, vector<32x32xf32>, vector<8x32xf32> -> vector<8x32xf32>
    %166 = vector.broadcast %31 : vector<1x32xf32> to vector<8x32xf32>
    %167 = arith.addf %165, %166 : vector<8x32xf32>
    %168 = vector.extract_strided_slice %17 {offsets = [32, 0], sizes = [8, 32], strides = [1, 1]} : vector<64x32xf32> to vector<8x32xf32>
    %169 = arith.addf %168, %163 : vector<8x32xf32>
    %170 = math.tanh %169 : vector<8x32xf32>
    %cst_53 = arith.constant 5.000000e-01 : f32
    %171 = vector.broadcast %cst_53 : f32 to vector<8x32xf32>
    %172 = arith.mulf %170, %171 : vector<8x32xf32>
    %cst_54 = arith.constant 5.000000e-01 : f32
    %173 = vector.broadcast %cst_54 : f32 to vector<8x32xf32>
    %174 = arith.addf %172, %173 : vector<8x32xf32>
    %175 = vector.extract_strided_slice %22 {offsets = [32, 0], sizes = [8, 32], strides = [1, 1]} : vector<64x32xf32> to vector<8x32xf32>
    %176 = arith.addf %175, %164 : vector<8x32xf32>
    %177 = math.tanh %176 : vector<8x32xf32>
    %cst_55 = arith.constant 5.000000e-01 : f32
    %178 = vector.broadcast %cst_55 : f32 to vector<8x32xf32>
    %179 = arith.mulf %177, %178 : vector<8x32xf32>
    %cst_56 = arith.constant 5.000000e-01 : f32
    %180 = vector.broadcast %cst_56 : f32 to vector<8x32xf32>
    %181 = arith.addf %179, %180 : vector<8x32xf32>
    %182 = vector.extract_strided_slice %27 {offsets = [32, 0], sizes = [8, 32], strides = [1, 1]} : vector<64x32xf32> to vector<8x32xf32>
    %183 = arith.mulf %174, %167 : vector<8x32xf32>
    %184 = arith.addf %182, %183 : vector<8x32xf32>
    %185 = math.tanh %184 : vector<8x32xf32>
    %186 = arith.subf %159, %185 : vector<8x32xf32>
    %187 = arith.mulf %181, %186 : vector<8x32xf32>
    %188 = arith.addf %185, %187 : vector<8x32xf32>
    %c4_i32 = arith.constant 4 : i32
    %189 = vector.broadcast %c4_i32 : i32 to vector<8x32xi32>
    %190 = arith.cmpi sgt, %33, %189 : vector<8x32xi32>
    %191 = arith.select %190, %188, %159 : vector<8x32xi1>, vector<8x32xf32>
    %cst_57 = arith.constant 0.000000e+00 : f32
    %192 = vector.broadcast %cst_57 : f32 to vector<8x32xf32>
    %193 = arith.select %190, %188, %192 : vector<8x32xi1>, vector<8x32xf32>
    %c0_58 = arith.constant 0 : index
    %c128 = arith.constant 128 : index
    %194 = vector.load %arg2[%c0_58, %c128] : memref<8x288xf32, #tpu.memory_space<vmem>>, vector<8x32xf32>
    tpu.vector_store %arg2[%c0_58, %c128], %193 {strides = array<i32>} : memref<8x288xf32, #tpu.memory_space<vmem>>, vector<8x32xf32>,
    %cst_59 = arith.constant dense<0.000000e+00> : vector<8x32xf32>
    %195 = tpu.matmul %191, %28, %cst_59 {dimension_numbers = #tpu.dot_dimension_numbers<[1], [0], [0], [1], [0, 0, 1, 1], [], []>} : vector<8x32xf32>, vector<32x32xf32>, vector<8x32xf32> -> vector<8x32xf32>
    %cst_60 = arith.constant dense<0.000000e+00> : vector<8x32xf32>
    %196 = tpu.matmul %191, %29, %cst_60 {dimension_numbers = #tpu.dot_dimension_numbers<[1], [0], [0], [1], [0, 0, 1, 1], [], []>} : vector<8x32xf32>, vector<32x32xf32>, vector<8x32xf32> -> vector<8x32xf32>
    %cst_61 = arith.constant dense<0.000000e+00> : vector<8x32xf32>
    %197 = tpu.matmul %191, %30, %cst_61 {dimension_numbers = #tpu.dot_dimension_numbers<[1], [0], [0], [1], [0, 0, 1, 1], [], []>} : vector<8x32xf32>, vector<32x32xf32>, vector<8x32xf32> -> vector<8x32xf32>
    %198 = vector.broadcast %31 : vector<1x32xf32> to vector<8x32xf32>
    %199 = arith.addf %197, %198 : vector<8x32xf32>
    %200 = vector.extract_strided_slice %17 {offsets = [40, 0], sizes = [8, 32], strides = [1, 1]} : vector<64x32xf32> to vector<8x32xf32>
    %201 = arith.addf %200, %195 : vector<8x32xf32>
    %202 = math.tanh %201 : vector<8x32xf32>
    %cst_62 = arith.constant 5.000000e-01 : f32
    %203 = vector.broadcast %cst_62 : f32 to vector<8x32xf32>
    %204 = arith.mulf %202, %203 : vector<8x32xf32>
    %cst_63 = arith.constant 5.000000e-01 : f32
    %205 = vector.broadcast %cst_63 : f32 to vector<8x32xf32>
    %206 = arith.addf %204, %205 : vector<8x32xf32>
    %207 = vector.extract_strided_slice %22 {offsets = [40, 0], sizes = [8, 32], strides = [1, 1]} : vector<64x32xf32> to vector<8x32xf32>
    %208 = arith.addf %207, %196 : vector<8x32xf32>
    %209 = math.tanh %208 : vector<8x32xf32>
    %cst_64 = arith.constant 5.000000e-01 : f32
    %210 = vector.broadcast %cst_64 : f32 to vector<8x32xf32>
    %211 = arith.mulf %209, %210 : vector<8x32xf32>
    %cst_65 = arith.constant 5.000000e-01 : f32
    %212 = vector.broadcast %cst_65 : f32 to vector<8x32xf32>
    %213 = arith.addf %211, %212 : vector<8x32xf32>
    %214 = vector.extract_strided_slice %27 {offsets = [40, 0], sizes = [8, 32], strides = [1, 1]} : vector<64x32xf32> to vector<8x32xf32>
    %215 = arith.mulf %206, %199 : vector<8x32xf32>
    %216 = arith.addf %214, %215 : vector<8x32xf32>
    %217 = math.tanh %216 : vector<8x32xf32>
    %218 = arith.subf %191, %217 : vector<8x32xf32>
    %219 = arith.mulf %213, %218 : vector<8x32xf32>
    %220 = arith.addf %217, %219 : vector<8x32xf32>
    %c5_i32 = arith.constant 5 : i32
    %221 = vector.broadcast %c5_i32 : i32 to vector<8x32xi32>
    %222 = arith.cmpi sgt, %33, %221 : vector<8x32xi32>
    %223 = arith.select %222, %220, %191 : vector<8x32xi1>, vector<8x32xf32>
    %cst_66 = arith.constant 0.000000e+00 : f32
    %224 = vector.broadcast %cst_66 : f32 to vector<8x32xf32>
    %225 = arith.select %222, %220, %224 : vector<8x32xi1>, vector<8x32xf32>
    %c0_67 = arith.constant 0 : index
    %c160 = arith.constant 160 : index
    %226 = vector.load %arg2[%c0_67, %c160] : memref<8x288xf32, #tpu.memory_space<vmem>>, vector<8x32xf32>
    tpu.vector_store %arg2[%c0_67, %c160], %225 {strides = array<i32>} : memref<8x288xf32, #tpu.memory_space<vmem>>, vector<8x32xf32>,
    %cst_68 = arith.constant dense<0.000000e+00> : vector<8x32xf32>
    %227 = tpu.matmul %223, %28, %cst_68 {dimension_numbers = #tpu.dot_dimension_numbers<[1], [0], [0], [1], [0, 0, 1, 1], [], []>} : vector<8x32xf32>, vector<32x32xf32>, vector<8x32xf32> -> vector<8x32xf32>
    %cst_69 = arith.constant dense<0.000000e+00> : vector<8x32xf32>
    %228 = tpu.matmul %223, %29, %cst_69 {dimension_numbers = #tpu.dot_dimension_numbers<[1], [0], [0], [1], [0, 0, 1, 1], [], []>} : vector<8x32xf32>, vector<32x32xf32>, vector<8x32xf32> -> vector<8x32xf32>
    %cst_70 = arith.constant dense<0.000000e+00> : vector<8x32xf32>
    %229 = tpu.matmul %223, %30, %cst_70 {dimension_numbers = #tpu.dot_dimension_numbers<[1], [0], [0], [1], [0, 0, 1, 1], [], []>} : vector<8x32xf32>, vector<32x32xf32>, vector<8x32xf32> -> vector<8x32xf32>
    %230 = vector.broadcast %31 : vector<1x32xf32> to vector<8x32xf32>
    %231 = arith.addf %229, %230 : vector<8x32xf32>
    %232 = vector.extract_strided_slice %17 {offsets = [48, 0], sizes = [8, 32], strides = [1, 1]} : vector<64x32xf32> to vector<8x32xf32>
    %233 = arith.addf %232, %227 : vector<8x32xf32>
    %234 = math.tanh %233 : vector<8x32xf32>
    %cst_71 = arith.constant 5.000000e-01 : f32
    %235 = vector.broadcast %cst_71 : f32 to vector<8x32xf32>
    %236 = arith.mulf %234, %235 : vector<8x32xf32>
    %cst_72 = arith.constant 5.000000e-01 : f32
    %237 = vector.broadcast %cst_72 : f32 to vector<8x32xf32>
    %238 = arith.addf %236, %237 : vector<8x32xf32>
    %239 = vector.extract_strided_slice %22 {offsets = [48, 0], sizes = [8, 32], strides = [1, 1]} : vector<64x32xf32> to vector<8x32xf32>
    %240 = arith.addf %239, %228 : vector<8x32xf32>
    %241 = math.tanh %240 : vector<8x32xf32>
    %cst_73 = arith.constant 5.000000e-01 : f32
    %242 = vector.broadcast %cst_73 : f32 to vector<8x32xf32>
    %243 = arith.mulf %241, %242 : vector<8x32xf32>
    %cst_74 = arith.constant 5.000000e-01 : f32
    %244 = vector.broadcast %cst_74 : f32 to vector<8x32xf32>
    %245 = arith.addf %243, %244 : vector<8x32xf32>
    %246 = vector.extract_strided_slice %27 {offsets = [48, 0], sizes = [8, 32], strides = [1, 1]} : vector<64x32xf32> to vector<8x32xf32>
    %247 = arith.mulf %238, %231 : vector<8x32xf32>
    %248 = arith.addf %246, %247 : vector<8x32xf32>
    %249 = math.tanh %248 : vector<8x32xf32>
    %250 = arith.subf %223, %249 : vector<8x32xf32>
    %251 = arith.mulf %245, %250 : vector<8x32xf32>
    %252 = arith.addf %249, %251 : vector<8x32xf32>
    %c6_i32 = arith.constant 6 : i32
    %253 = vector.broadcast %c6_i32 : i32 to vector<8x32xi32>
    %254 = arith.cmpi sgt, %33, %253 : vector<8x32xi32>
    %255 = arith.select %254, %252, %223 : vector<8x32xi1>, vector<8x32xf32>
    %cst_75 = arith.constant 0.000000e+00 : f32
    %256 = vector.broadcast %cst_75 : f32 to vector<8x32xf32>
    %257 = arith.select %254, %252, %256 : vector<8x32xi1>, vector<8x32xf32>
    %c0_76 = arith.constant 0 : index
    %c192 = arith.constant 192 : index
    %258 = vector.load %arg2[%c0_76, %c192] : memref<8x288xf32, #tpu.memory_space<vmem>>, vector<8x32xf32>
    tpu.vector_store %arg2[%c0_76, %c192], %257 {strides = array<i32>} : memref<8x288xf32, #tpu.memory_space<vmem>>, vector<8x32xf32>,
    %cst_77 = arith.constant dense<0.000000e+00> : vector<8x32xf32>
    %259 = tpu.matmul %255, %28, %cst_77 {dimension_numbers = #tpu.dot_dimension_numbers<[1], [0], [0], [1], [0, 0, 1, 1], [], []>} : vector<8x32xf32>, vector<32x32xf32>, vector<8x32xf32> -> vector<8x32xf32>
    %cst_78 = arith.constant dense<0.000000e+00> : vector<8x32xf32>
    %260 = tpu.matmul %255, %29, %cst_78 {dimension_numbers = #tpu.dot_dimension_numbers<[1], [0], [0], [1], [0, 0, 1, 1], [], []>} : vector<8x32xf32>, vector<32x32xf32>, vector<8x32xf32> -> vector<8x32xf32>
    %cst_79 = arith.constant dense<0.000000e+00> : vector<8x32xf32>
    %261 = tpu.matmul %255, %30, %cst_79 {dimension_numbers = #tpu.dot_dimension_numbers<[1], [0], [0], [1], [0, 0, 1, 1], [], []>} : vector<8x32xf32>, vector<32x32xf32>, vector<8x32xf32> -> vector<8x32xf32>
    %262 = vector.broadcast %31 : vector<1x32xf32> to vector<8x32xf32>
    %263 = arith.addf %261, %262 : vector<8x32xf32>
    %264 = vector.extract_strided_slice %17 {offsets = [56, 0], sizes = [8, 32], strides = [1, 1]} : vector<64x32xf32> to vector<8x32xf32>
    %265 = arith.addf %264, %259 : vector<8x32xf32>
    %266 = math.tanh %265 : vector<8x32xf32>
    %cst_80 = arith.constant 5.000000e-01 : f32
    %267 = vector.broadcast %cst_80 : f32 to vector<8x32xf32>
    %268 = arith.mulf %266, %267 : vector<8x32xf32>
    %cst_81 = arith.constant 5.000000e-01 : f32
    %269 = vector.broadcast %cst_81 : f32 to vector<8x32xf32>
    %270 = arith.addf %268, %269 : vector<8x32xf32>
    %271 = vector.extract_strided_slice %22 {offsets = [56, 0], sizes = [8, 32], strides = [1, 1]} : vector<64x32xf32> to vector<8x32xf32>
    %272 = arith.addf %271, %260 : vector<8x32xf32>
    %273 = math.tanh %272 : vector<8x32xf32>
    %cst_82 = arith.constant 5.000000e-01 : f32
    %274 = vector.broadcast %cst_82 : f32 to vector<8x32xf32>
    %275 = arith.mulf %273, %274 : vector<8x32xf32>
    %cst_83 = arith.constant 5.000000e-01 : f32
    %276 = vector.broadcast %cst_83 : f32 to vector<8x32xf32>
    %277 = arith.addf %275, %276 : vector<8x32xf32>
    %278 = vector.extract_strided_slice %27 {offsets = [56, 0], sizes = [8, 32], strides = [1, 1]} : vector<64x32xf32> to vector<8x32xf32>
    %279 = arith.mulf %270, %263 : vector<8x32xf32>
    %280 = arith.addf %278, %279 : vector<8x32xf32>
    %281 = math.tanh %280 : vector<8x32xf32>
    %282 = arith.subf %255, %281 : vector<8x32xf32>
    %283 = arith.mulf %277, %282 : vector<8x32xf32>
    %284 = arith.addf %281, %283 : vector<8x32xf32>
    %c7_i32 = arith.constant 7 : i32
    %285 = vector.broadcast %c7_i32 : i32 to vector<8x32xi32>
    %286 = arith.cmpi sgt, %33, %285 : vector<8x32xi32>
    %287 = arith.select %286, %284, %255 : vector<8x32xi1>, vector<8x32xf32>
    %cst_84 = arith.constant 0.000000e+00 : f32
    %288 = vector.broadcast %cst_84 : f32 to vector<8x32xf32>
    %289 = arith.select %286, %284, %288 : vector<8x32xi1>, vector<8x32xf32>
    %c0_85 = arith.constant 0 : index
    %c224 = arith.constant 224 : index
    %290 = vector.load %arg2[%c0_85, %c224] : memref<8x288xf32, #tpu.memory_space<vmem>>, vector<8x32xf32>
    tpu.vector_store %arg2[%c0_85, %c224], %289 {strides = array<i32>} : memref<8x288xf32, #tpu.memory_space<vmem>>, vector<8x32xf32>,
    %c0_86 = arith.constant 0 : index
    %c256 = arith.constant 256 : index
    %291 = vector.load %arg2[%c0_86, %c256] : memref<8x288xf32, #tpu.memory_space<vmem>>, vector<8x32xf32>
    tpu.vector_store %arg2[%c0_86, %c256], %287 {strides = array<i32>} : memref<8x288xf32, #tpu.memory_space<vmem>>, vector<8x32xf32>,
    return
  }
}

</mosaic_0001>

<llo_original>
// kernel: _encoder_forward.1
$region0: #{_encoder_forward.1}
  #allocation0 [shape = 'u32[]', space=smem, size = 0x4, offset = 0x4, fixed_abs, tag = 'smem constant byte address 0x4 - core index']
  #allocation1 [shape = 'u32[144,128]{1,0:T(1,128)}', space=vmem, size = 0x12000, scoped, tag = 'internal scratch']
  %s0 = inlined_call_operand.vmem [shape: s32[72,1], index: 0, kind: input, shape index: {}]
  %s1 = inlined_call_operand.vmem [shape: f32[3,64,32], index: 1, kind: input, shape index: {}]
  %s2 = inlined_call_operand.vmem [shape: f32[8,288], index: 2, kind: output, shape index: {}]
  %s3 = sld [smem:[#allocation0]]
  $region18: #{_encoder_forward.1} parent=0
    _
  %s5 = ssub.s32 1, %s3
  %s6 = scalar_select 0, %s5, %s3
  // Predicated region
  $region2: #{_encoder_forward.1} parent=0 // pred_check
    _
  $region3: #{_encoder_forward.1} parent=0 // pred_check_branch
    %8 = sbr.rel (0) target = $region5
  $region4: #{_encoder_forward.1} parent=0 // pred_region
    _
  $region5: #{_encoder_forward.1} parent=0 // pred_fallthru
    _
  // Predicated region
  $region6: #{_encoder_forward.1} parent=0 // pred_check
    _
  $region7: #{_encoder_forward.1} parent=0 // pred_check_branch
    %10 = sbr.rel (0) target = $region9
  $region8: #{_encoder_forward.1} parent=0 // pred_region
    _
  $region9: #{_encoder_forward.1} parent=0 // pred_fallthru
    _
  %v11 = vld [vmem:[%s0] sm:$0xff]
  %v12 = vld [vmem:[%s0 + $0x8] sm:$0xff]
  %v13 = vld [vmem:[%s0 + $0x10] sm:$0xff]
  %v14 = vld [vmem:[%s0 + $0x18] sm:$0xff]
  %v15 = vld [vmem:[%s0 + $0x20] sm:$0xff]
  %v16 = vld [vmem:[%s0 + $0x28] sm:$0xff]
  %v17 = vld [vmem:[%s0 + $0x30] sm:$0xff]
  %v18 = vld [vmem:[%s0 + $0x38] sm:$0xff]
  %v19 = vld [vmem:[%s0 + $0x40] sm:$0xff]
  %v20 = vlaneseq
  %v21 = vand.u32 %v20, 127
  %22 = vset.pattern.permute.xlu0 0
  %23 = vperm.xlu0 %22, %v11
  %v24 = vpop.permute.xlu0 %23
  %25 = vset.pattern.permute.xlu0 0
  %26 = vperm.xlu0 %25, %v12
  %v27 = vpop.permute.xlu0 %26
  %28 = vset.pattern.permute.xlu0 0
  %29 = vperm.xlu0 %28, %v13
  %v30 = vpop.permute.xlu0 %29
  %31 = vset.pattern.permute.xlu0 0
  %32 = vperm.xlu0 %31, %v14
  %v33 = vpop.permute.xlu0 %32
  %34 = vset.pattern.permute.xlu0 0
  %35 = vperm.xlu0 %34, %v15
  %v36 = vpop.permute.xlu0 %35
  %37 = vset.pattern.permute.xlu0 0
  %38 = vperm.xlu0 %37, %v16
  %v39 = vpop.permute.xlu0 %38
  %40 = vset.pattern.permute.xlu0 0
  %41 = vperm.xlu0 %40, %v17
  %v42 = vpop.permute.xlu0 %41
  %43 = vset.pattern.permute.xlu0 0
  %44 = vperm.xlu0 %43, %v18
  %v45 = vpop.permute.xlu0 %44
  %vm46 = vcmp.eq.s32.totalorder %v24, %v21
  %vm47 = vcmp.eq.s32.totalorder %v27, %v21
  %vm48 = vcmp.eq.s32.totalorder %v30, %v21
  %vm49 = vcmp.eq.s32.totalorder %v33, %v21
  %vm50 = vcmp.eq.s32.totalorder %v36, %v21
  %vm51 = vcmp.eq.s32.totalorder %v39, %v21
  %vm52 = vcmp.eq.s32.totalorder %v42, %v21
  %vm53 = vcmp.eq.s32.totalorder %v45, %v21
  %v54 = vsel %vm46, 1, 0
  %v55 = vsel %vm47, 1, 0
  %v56 = vsel %vm48, 1, 0
  %v57 = vsel %vm49, 1, 0
  %v58 = vsel %vm50, 1, 0
  %v59 = vsel %vm51, 1, 0
  %v60 = vsel %vm52, 1, 0
  %v61 = vsel %vm53, 1, 0
  %v62 = vcvt.s32.f32 %v54
  %v63 = vcvt.s32.f32 %v55
  %v64 = vcvt.s32.f32 %v56
  %v65 = vcvt.s32.f32 %v57
  %v66 = vcvt.s32.f32 %v58
  %v67 = vcvt.s32.f32 %v59
  %v68 = vcvt.s32.f32 %v60
  %v69 = vcvt.s32.f32 %v61
  %v70 = vld [vmem:[%s1] sm:$0xff]
  %v71 = vld [vmem:[%s1 + $0x8] sm:$0xff]
  %v72 = vld [vmem:[%s1 + $0x10] sm:$0xff]
  %v73 = vld [vmem:[%s1 + $0x18] sm:$0xff]
  %v74 = vld [vmem:[%s1 + $0x20] sm:$0xff]
  %v75 = vld [vmem:[%s1 + $0x28] sm:$0xff]
  %v76 = vld [vmem:[%s1 + $0x30] sm:$0xff]
  %v77 = vld [vmem:[%s1 + $0x38] sm:$0xff]
  %s78 = scalar_lea.vmem %s1, 64
  %v79 = vld [vmem:[%s78] sm:$0xff]
  %v80 = vld [vmem:[%s78 + $0x8] sm:$0xff]
  %v81 = vld [vmem:[%s78 + $0x10] sm:$0xff]
  %v82 = vld [vmem:[%s78 + $0x18] sm:$0xff]
  %v83 = vld [vmem:[%s78 + $0x20] sm:$0xff]
  %v84 = vld [vmem:[%s78 + $0x28] sm:$0xff]
  %v85 = vld [vmem:[%s78 + $0x30] sm:$0xff]
  %v86 = vld [vmem:[%s78 + $0x38] sm:$0xff]
  %s87 = scalar_lea.vmem %s1, 128
  %v88 = vld [vmem:[%s87] sm:$0xff]
  %v89 = vld [vmem:[%s87 + $0x8] sm:$0xff]
  %v90 = vld [vmem:[%s87 + $0x10] sm:$0xff]
  %v91 = vld [vmem:[%s87 + $0x18] sm:$0xff]
  %v92 = vld [vmem:[%s87 + $0x20] sm:$0xff]
  %v93 = vld [vmem:[%s87 + $0x28] sm:$0xff]
  %v94 = vld [vmem:[%s87 + $0x30] sm:$0xff]
  %v95 = vld [vmem:[%s87 + $0x38] sm:$0xff]
  %v96 = vlaneseq
  %v97 = vshrl.u32 %v96, 7
  %v98 = vsub.s32 0, %v97
  %v99 = vrot.slane %v77, %v98
  %vm100 = vcmask 195584
  %v102 = vsel %vm100, %v62, 0
  %v105 = vsel %vm100, %v63, 0
  %v108 = vsel %vm100, %v64, 0
  %v111 = vsel %vm100, %v65, 0
  %v114 = vsel %vm100, %v66, 0
  %v117 = vsel %vm100, %v67, 0
  %v120 = vsel %vm100, %v68, 0
  %v123 = vsel %vm100, %v69, 0
  %125 = vmatprep.subr.mxu0 0.0
  %126 = vmatpush1.msra.mxu0 %v70
  %127 = vmatprep.subr.mxu0 0.0
  %128 = vmatpush1.msra.mxu0 %v71
  %129 = vmatprep.subr.mxu0 0.0
  %130 = vmatpush1.msra.mxu0 %v72
  %131 = vmatprep.subr.mxu0 0.0
  %132 = vmatpush1.msra.mxu0 0.0
  %133 = vmatprep.subr.mxu0 0.0
  %134 = vmatpush1.msra.mxu0 0.0
  %135 = vmatprep.subr.mxu0 0.0
  %136 = vmatpush1.msra.mxu0 0.0
  %137 = vmatprep.subr.mxu0 0.0
  %138 = vmatpush1.msra.mxu0 0.0
  %139 = vmatprep.subr.mxu0 0.0
  %140 = vmatpush1.msra.mxu0 0.0
  %141 = vmatprep.subr.mxu0 0.0
  %142 = vmatpush1.msra.mxu0 0.0
  %143 = vmatprep.subr.mxu0 0.0
  %144 = vmatpush1.msra.mxu0 0.0
  %145 = vmatprep.subr.mxu0 0.0
  %146 = vmatpush1.msra.mxu0 0.0
  %147 = vmatprep.subr.mxu0 0.0
  %148 = vmatpush1.msra.mxu0 0.0
  %149 = vmatprep.subr.mxu0 0.0
  %150 = vmatpush1.msra.mxu0 0.0
  %151 = vmatprep.subr.mxu0 0.0
  %152 = vmatpush1.msra.mxu0 0.0
  %153 = vmatprep.subr.mxu0 0.0
  %154 = vmatpush1.msra.mxu0 0.0
  %155 = vmatprep.subr.mxu0 0.0
  %156 = vmatpush1.msra.mxu0 0.0
  %157 = vmatprep.subr.mxu0 0.0
  %158 = vmatpush1.msra.mxu0 0.0
  %159 = vmatprep.subr.mxu0 0.0
  %160 = vmatpush1.msra.mxu0 0.0
  %161 = vmatprep.subr.mxu0 0.0
  %162 = vmatpush1.msra.mxu0 0.0
  %163 = vmatprep.subr.mxu0 0.0
  %164 = vmatpush1.msra.mxu0 0.0
  %165 = vmatprep.subr.mxu0 0.0
  %166 = vmatpush1.msra.mxu0 0.0
  %167 = vmatprep.subr.mxu0 0.0
  %168 = vmatpush1.msra.mxu0 0.0
  %169 = vmatprep.subr.mxu0 0.0
  %170 = vmatpush1.msra.mxu0 0.0
  %171 = vmatprep.subr.mxu0 0.0
  %172 = vmatpush1.msra.mxu0 0.0
  %173 = vmatprep.subr.mxu0 0.0
  %174 = vmatpush1.msra.mxu0 0.0
  %175 = vmatprep.subr.mxu0 0.0
  %176 = vmatpush1.msra.mxu0 0.0
  %177 = vmatprep.subr.mxu0 0.0
  %178 = vmatpush1.msra.mxu0 0.0
  %179 = vmatprep.subr.mxu0 0.0
  %180 = vmatpush1.msra.mxu0 0.0
  %181 = vmatprep.subr.mxu0 0.0
  %182 = vmatpush1.msra.mxu0 0.0
  %183 = vmatprep.subr.mxu0 0.0
  %184 = vmatpush1.msra.mxu0 0.0
  %185 = vmatprep.subr.mxu0 0.0
  %186 = vmatpush1.msra.mxu0 0.0
  %187 = vmatprep.subr.mxu0 0.0
  %188 = vmatpush1.msra.mxu0 0.0
  %189 = vmatprep.mubr.f32.mxu0 0.0
  %190 = vmatmul.mubr.f32.gmra.mrb[0].mxu0 %v102
  %v191 = vpop.f32.mrb[0].mxu0
  %v192 = vadd.f32 %v99, %v191
  %v193 = vpop.f32.mrb[0].mxu0
  %194 = vmatprep.mubr.f32.mxu0 0.0
  %195 = vmatmul.mubr.f32.gmra.mrb[0].mxu0 %v105
  %v196 = vpop.f32.mrb[0].mxu0
  %v197 = vadd.f32 %v99, %v196
  %v198 = vpop.f32.mrb[0].mxu0
  %199 = vmatprep.mubr.f32.mxu0 0.0
  %200 = vmatmul.mubr.f32.gmra.mrb[0].mxu0 %v108
  %v201 = vpop.f32.mrb[0].mxu0
  %v202 = vadd.f32 %v99, %v201
  %v203 = vpop.f32.mrb[0].mxu0
  %204 = vmatprep.mubr.f32.mxu0 0.0
  %205 = vmatmul.mubr.f32.gmra.mrb[0].mxu0 %v111
  %v206 = vpop.f32.mrb[0].mxu0
  %v207 = vadd.f32 %v99, %v206
  %v208 = vpop.f32.mrb[0].mxu0
  %209 = vmatprep.mubr.f32.mxu0 0.0
  %210 = vmatmul.mubr.f32.gmra.mrb[0].mxu0 %v114
  %v211 = vpop.f32.mrb[0].mxu0
  %v212 = vadd.f32 %v99, %v211
  %v213 = vpop.f32.mrb[0].mxu0
  %214 = vmatprep.mubr.f32.mxu0 0.0
  %215 = vmatmul.mubr.f32.gmra.mrb[0].mxu0 %v117
  %v216 = vpop.f32.mrb[0].mxu0
  %v217 = vadd.f32 %v99, %v216
  %v218 = vpop.f32.mrb[0].mxu0
  %219 = vmatprep.mubr.f32.mxu0 0.0
  %220 = vmatmul.mubr.f32.gmra.mrb[0].mxu0 %v120
  %v221 = vpop.f32.mrb[0].mxu0
  %v222 = vadd.f32 %v99, %v221
  %v223 = vpop.f32.mrb[0].mxu0
  %224 = vmatprep.mubr.f32.mxu0 0.0
  %225 = vmatmul.mubr.f32.gmra.mrb[0].mxu0 %v123
  %v226 = vpop.f32.mrb[0].mxu0
  %v227 = vadd.f32 %v99, %v226
  %v228 = vpop.f32.mrb[0].mxu0
  %229 = vdwg.mxu0
  %v230 = vlaneseq
  %v231 = vshrl.u32 %v230, 7
  %v232 = vsub.s32 0, %v231
  %v233 = vrot.slane %v86, %v232
  %234 = vmatprep.subr.mxu0 0.0
  %235 = vmatpush1.msra.mxu0 %v79
  %236 = vmatprep.subr.mxu0 0.0
  %237 = vmatpush1.msra.mxu0 %v80
  %238 = vmatprep.subr.mxu0 0.0
  %239 = vmatpush1.msra.mxu0 %v81
  %240 = vmatprep.subr.mxu0 0.0
  %241 = vmatpush1.msra.mxu0 0.0
  %242 = vmatprep.subr.mxu0 0.0
  %243 = vmatpush1.msra.mxu0 0.0
  %244 = vmatprep.subr.mxu0 0.0
  %245 = vmatpush1.msra.mxu0 0.0
  %246 = vmatprep.subr.mxu0 0.0
  %247 = vmatpush1.msra.mxu0 0.0
  %248 = vmatprep.subr.mxu0 0.0
  %249 = vmatpush1.msra.mxu0 0.0
  %250 = vmatprep.subr.mxu0 0.0
  %251 = vmatpush1.msra.mxu0 0.0
  %252 = vmatprep.subr.mxu0 0.0
  %253 = vmatpush1.msra.mxu0 0.0
  %254 = vmatprep.subr.mxu0 0.0
  %255 = vmatpush1.msra.mxu0 0.0
  %256 = vmatprep.subr.mxu0 0.0
  %257 = vmatpush1.msra.mxu0 0.0
  %258 = vmatprep.subr.mxu0 0.0
  %259 = vmatpush1.msra.mxu0 0.0
  %260 = vmatprep.subr.mxu0 0.0
  %261 = vmatpush1.msra.mxu0 0.0
  %262 = vmatprep.subr.mxu0 0.0
  %263 = vmatpush1.msra.mxu0 0.0
  %264 = vmatprep.subr.mxu0 0.0
  %265 = vmatpush1.msra.mxu0 0.0
  %266 = vmatprep.subr.mxu0 0.0
  %267 = vmatpush1.msra.mxu0 0.0
  %268 = vmatprep.subr.mxu0 0.0
  %269 = vmatpush1.msra.mxu0 0.0
  %270 = vmatprep.subr.mxu0 0.0
  %271 = vmatpush1.msra.mxu0 0.0
  %272 = vmatprep.subr.mxu0 0.0
  %273 = vmatpush1.msra.mxu0 0.0
  %274 = vmatprep.subr.mxu0 0.0
  %275 = vmatpush1.msra.mxu0 0.0
  %276 = vmatprep.subr.mxu0 0.0
  %277 = vmatpush1.msra.mxu0 0.0
  %278 = vmatprep.subr.mxu0 0.0
  %279 = vmatpush1.msra.mxu0 0.0
  %280 = vmatprep.subr.mxu0 0.0
  %281 = vmatpush1.msra.mxu0 0.0
  %282 = vmatprep.subr.mxu0 0.0
  %283 = vmatpush1.msra.mxu0 0.0
  %284 = vmatprep.subr.mxu0 0.0
  %285 = vmatpush1.msra.mxu0 0.0
  %286 = vmatprep.subr.mxu0 0.0
  %287 = vmatpush1.msra.mxu0 0.0
  %288 = vmatprep.subr.mxu0 0.0
  %289 = vmatpush1.msra.mxu0 0.0
  %290 = vmatprep.subr.mxu0 0.0
  %291 = vmatpush1.msra.mxu0 0.0
  %292 = vmatprep.subr.mxu0 0.0
  %293 = vmatpush1.msra.mxu0 0.0
  %294 = vmatprep.subr.mxu0 0.0
  %295 = vmatpush1.msra.mxu0 0.0
  %296 = vmatprep.subr.mxu0 0.0
  %297 = vmatpush1.msra.mxu0 0.0
  %298 = vmatprep.mubr.f32.mxu0 0.0
  %299 = vmatmul.mubr.f32.gmra.mrb[0].mxu0 %v102
  %v300 = vpop.f32.mrb[0].mxu0
  %v301 = vadd.f32 %v233, %v300
  %v302 = vpop.f32.mrb[0].mxu0
  %303 = vmatprep.mubr.f32.mxu0 0.0
  %304 = vmatmul.mubr.f32.gmra.mrb[0].mxu0 %v105
  %v305 = vpop.f32.mrb[0].mxu0
  %v306 = vadd.f32 %v233, %v305
  %v307 = vpop.f32.mrb[0].mxu0
  %308 = vmatprep.mubr.f32.mxu0 0.0
  %309 = vmatmul.mubr.f32.gmra.mrb[0].mxu0 %v108
  %v310 = vpop.f32.mrb[0].mxu0
  %v311 = vadd.f32 %v233, %v310
  %v312 = vpop.f32.mrb[0].mxu0
  %313 = vmatprep.mubr.f32.mxu0 0.0
  %314 = vmatmul.mubr.f32.gmra.mrb[0].mxu0 %v111
  %v315 = vpop.f32.mrb[0].mxu0
  %v316 = vadd.f32 %v233, %v315
  %v317 = vpop.f32.mrb[0].mxu0
  %318 = vmatprep.mubr.f32.mxu0 0.0
  %319 = vmatmul.mubr.f32.gmra.mrb[0].mxu0 %v114
  %v320 = vpop.f32.mrb[0].mxu0
  %v321 = vadd.f32 %v233, %v320
  %v322 = vpop.f32.mrb[0].mxu0
  %323 = vmatprep.mubr.f32.mxu0 0.0
  %324 = vmatmul.mubr.f32.gmra.mrb[0].mxu0 %v117
  %v325 = vpop.f32.mrb[0].mxu0
  %v326 = vadd.f32 %v233, %v325
  %v327 = vpop.f32.mrb[0].mxu0
  %328 = vmatprep.mubr.f32.mxu0 0.0
  %329 = vmatmul.mubr.f32.gmra.mrb[0].mxu0 %v120
  %v330 = vpop.f32.mrb[0].mxu0
  %v331 = vadd.f32 %v233, %v330
  %v332 = vpop.f32.mrb[0].mxu0
  %333 = vmatprep.mubr.f32.mxu0 0.0
  %334 = vmatmul.mubr.f32.gmra.mrb[0].mxu0 %v123
  %v335 = vpop.f32.mrb[0].mxu0
  %v336 = vadd.f32 %v233, %v335
  %v337 = vpop.f32.mrb[0].mxu0
  %338 = vdwg.mxu0
  %v339 = vlaneseq
  %v340 = vshrl.u32 %v339, 7
  %v341 = vsub.s32 0, %v340
  %v342 = vrot.slane %v95, %v341
  %343 = vmatprep.subr.mxu0 0.0
  %344 = vmatpush1.msra.mxu0 %v88
  %345 = vmatprep.subr.mxu0 0.0
  %346 = vmatpush1.msra.mxu0 %v89
  %347 = vmatprep.subr.mxu0 0.0
  %348 = vmatpush1.msra.mxu0 %v90
  %349 = vmatprep.subr.mxu0 0.0
  %350 = vmatpush1.msra.mxu0 0.0
  %351 = vmatprep.subr.mxu0 0.0
  %352 = vmatpush1.msra.mxu0 0.0
  %353 = vmatprep.subr.mxu0 0.0
  %354 = vmatpush1.msra.mxu0 0.0
  %355 = vmatprep.subr.mxu0 0.0
  %356 = vmatpush1.msra.mxu0 0.0
  %357 = vmatprep.subr.mxu0 0.0
  %358 = vmatpush1.msra.mxu0 0.0
  %359 = vmatprep.subr.mxu0 0.0
  %360 = vmatpush1.msra.mxu0 0.0
  %361 = vmatprep.subr.mxu0 0.0
  %362 = vmatpush1.msra.mxu0 0.0
  %363 = vmatprep.subr.mxu0 0.0
  %364 = vmatpush1.msra.mxu0 0.0
  %365 = vmatprep.subr.mxu0 0.0
  %366 = vmatpush1.msra.mxu0 0.0
  %367 = vmatprep.subr.mxu0 0.0
  %368 = vmatpush1.msra.mxu0 0.0
  %369 = vmatprep.subr.mxu0 0.0
  %370 = vmatpush1.msra.mxu0 0.0
  %371 = vmatprep.subr.mxu0 0.0
  %372 = vmatpush1.msra.mxu0 0.0
  %373 = vmatprep.subr.mxu0 0.0
  %374 = vmatpush1.msra.mxu0 0.0
  %375 = vmatprep.subr.mxu0 0.0
  %376 = vmatpush1.msra.mxu0 0.0
  %377 = vmatprep.subr.mxu0 0.0
  %378 = vmatpush1.msra.mxu0 0.0
  %379 = vmatprep.subr.mxu0 0.0
  %380 = vmatpush1.msra.mxu0 0.0
  %381 = vmatprep.subr.mxu0 0.0
  %382 = vmatpush1.msra.mxu0 0.0
  %383 = vmatprep.subr.mxu0 0.0
  %384 = vmatpush1.msra.mxu0 0.0
  %385 = vmatprep.subr.mxu0 0.0
  %386 = vmatpush1.msra.mxu0 0.0
  %387 = vmatprep.subr.mxu0 0.0
  %388 = vmatpush1.msra.mxu0 0.0
  %389 = vmatprep.subr.mxu0 0.0
  %390 = vmatpush1.msra.mxu0 0.0
  %391 = vmatprep.subr.mxu0 0.0
  %392 = vmatpush1.msra.mxu0 0.0
  %393 = vmatprep.subr.mxu0 0.0
  %394 = vmatpush1.msra.mxu0 0.0
  %395 = vmatprep.subr.mxu0 0.0
  %396 = vmatpush1.msra.mxu0 0.0
  %397 = vmatprep.subr.mxu0 0.0
  %398 = vmatpush1.msra.mxu0 0.0
  %399 = vmatprep.subr.mxu0 0.0
  %400 = vmatpush1.msra.mxu0 0.0
  %401 = vmatprep.subr.mxu0 0.0
  %402 = vmatpush1.msra.mxu0 0.0
  %403 = vmatprep.subr.mxu0 0.0
  %404 = vmatpush1.msra.mxu0 0.0
  %405 = vmatprep.subr.mxu0 0.0
  %406 = vmatpush1.msra.mxu0 0.0
  %407 = vmatprep.mubr.f32.mxu0 0.0
  %408 = vmatmul.mubr.f32.gmra.mrb[0].mxu0 %v102
  %v409 = vpop.f32.mrb[0].mxu0
  %v410 = vadd.f32 %v342, %v409
  %v411 = vpop.f32.mrb[0].mxu0
  %412 = vmatprep.mubr.f32.mxu0 0.0
  %413 = vmatmul.mubr.f32.gmra.mrb[0].mxu0 %v105
  %v414 = vpop.f32.mrb[0].mxu0
  %v415 = vadd.f32 %v342, %v414
  %v416 = vpop.f32.mrb[0].mxu0
  %417 = vmatprep.mubr.f32.mxu0 0.0
  %418 = vmatmul.mubr.f32.gmra.mrb[0].mxu0 %v108
  %v419 = vpop.f32.mrb[0].mxu0
  %v420 = vadd.f32 %v342, %v419
  %v421 = vpop.f32.mrb[0].mxu0
  %422 = vmatprep.mubr.f32.mxu0 0.0
  %423 = vmatmul.mubr.f32.gmra.mrb[0].mxu0 %v111
  %v424 = vpop.f32.mrb[0].mxu0
  %v425 = vadd.f32 %v342, %v424
  %v426 = vpop.f32.mrb[0].mxu0
  %427 = vmatprep.mubr.f32.mxu0 0.0
  %428 = vmatmul.mubr.f32.gmra.mrb[0].mxu0 %v114
  %v429 = vpop.f32.mrb[0].mxu0
  %v430 = vadd.f32 %v342, %v429
  %v431 = vpop.f32.mrb[0].mxu0
  %432 = vmatprep.mubr.f32.mxu0 0.0
  %433 = vmatmul.mubr.f32.gmra.mrb[0].mxu0 %v117
  %v434 = vpop.f32.mrb[0].mxu0
  %v435 = vadd.f32 %v342, %v434
  %v436 = vpop.f32.mrb[0].mxu0
  %437 = vmatprep.mubr.f32.mxu0 0.0
  %438 = vmatmul.mubr.f32.gmra.mrb[0].mxu0 %v120
  %v439 = vpop.f32.mrb[0].mxu0
  %v440 = vadd.f32 %v342, %v439
  %v441 = vpop.f32.mrb[0].mxu0
  %442 = vmatprep.mubr.f32.mxu0 0.0
  %443 = vmatmul.mubr.f32.gmra.mrb[0].mxu0 %v123
  %v444 = vpop.f32.mrb[0].mxu0
  %v445 = vadd.f32 %v342, %v444
  %v446 = vpop.f32.mrb[0].mxu0
  %447 = vdwg.mxu0
  %448 = vset.pattern.permute.xlu0 0
  %449 = vperm.xlu0 %448, %v19
  %v450 = vpop.permute.xlu0 %449
  %vm451 = vcmask 261120
  %v453 = vsel %vm451, 0.0, 0
  %455 = vmatprep.subr.mxu0 0.0
  %456 = vmatpush1.msra.mxu0 %v73
  %457 = vmatprep.subr.mxu0 0.0
  %458 = vmatpush1.msra.mxu0 %v74
  %459 = vmatprep.subr.mxu0 0.0
  %460 = vmatpush1.msra.mxu0 %v75
  %461 = vmatprep.subr.mxu0 0.0
  %462 = vmatpush1.msra.mxu0 %v76
  %463 = vmatprep.subr.mxu0 0.0
  %464 = vmatpush1.msra.mxu0 0.0
  %465 = vmatprep.subr.mxu0 0.0
  %466 = vmatpush1.msra.mxu0 0.0
  %467 = vmatprep.subr.mxu0 0.0
  %468 = vmatpush1.msra.mxu0 0.0
  %469 = vmatprep.subr.mxu0 0.0
  %470 = vmatpush1.msra.mxu0 0.0
  %471 = vmatprep.subr.mxu0 0.0
  %472 = vmatpush1.msra.mxu0 0.0
  %473 = vmatprep.subr.mxu0 0.0
  %474 = vmatpush1.msra.mxu0 0.0
  %475 = vmatprep.subr.mxu0 0.0
  %476 = vmatpush1.msra.mxu0 0.0
  %477 = vmatprep.subr.mxu0 0.0
  %478 = vmatpush1.msra.mxu0 0.0
  %479 = vmatprep.subr.mxu0 0.0
  %480 = vmatpush1.msra.mxu0 0.0
  %481 = vmatprep.subr.mxu0 0.0
  %482 = vmatpush1.msra.mxu0 0.0
  %483 = vmatprep.subr.mxu0 0.0
  %484 = vmatpush1.msra.mxu0 0.0
  %485 = vmatprep.subr.mxu0 0.0
  %486 = vmatpush1.msra.mxu0 0.0
  %487 = vmatprep.subr.mxu0 0.0
  %488 = vmatpush1.msra.mxu0 0.0
  %489 = vmatprep.subr.mxu0 0.0
  %490 = vmatpush1.msra.mxu0 0.0
  %491 = vmatprep.subr.mxu0 0.0
  %492 = vmatpush1.msra.mxu0 0.0
  %493 = vmatprep.subr.mxu0 0.0
  %494 = vmatpush1.msra.mxu0 0.0
  %495 = vmatprep.subr.mxu0 0.0
  %496 = vmatpush1.msra.mxu0 0.0
  %497 = vmatprep.subr.mxu0 0.0
  %498 = vmatpush1.msra.mxu0 0.0
  %499 = vmatprep.subr.mxu0 0.0
  %500 = vmatpush1.msra.mxu0 0.0
  %501 = vmatprep.subr.mxu0 0.0
  %502 = vmatpush1.msra.mxu0 0.0
  %503 = vmatprep.subr.mxu0 0.0
  %504 = vmatpush1.msra.mxu0 0.0
  %505 = vmatprep.subr.mxu0 0.0
  %506 = vmatpush1.msra.mxu0 0.0
  %507 = vmatprep.subr.mxu0 0.0
  %508 = vmatpush1.msra.mxu0 0.0
  %509 = vmatprep.subr.mxu0 0.0
  %510 = vmatpush1.msra.mxu0 0.0
  %511 = vmatprep.subr.mxu0 0.0
  %512 = vmatpush1.msra.mxu0 0.0
  %513 = vmatprep.subr.mxu0 0.0
  %514 = vmatpush1.msra.mxu0 0.0
  %515 = vmatprep.subr.mxu0 0.0
  %516 = vmatpush1.msra.mxu0 0.0
  %517 = vmatprep.subr.mxu0 0.0
  %518 = vmatpush1.msra.mxu0 0.0
  %519 = vmatprep.mubr.f32.mxu0 0.0
  %520 = vmatmul.mubr.f32.gmra.mrb[0].mxu0 %v453
  %v521 = vpop.f32.mrb[0].mxu0
  %v522 = vadd.f32 0.0, %v521
  %v523 = vpop.f32.mrb[0].mxu0
  %524 = vdwg.mxu0
  %525 = vmatprep.subr.mxu0 0.0
  %526 = vmatpush1.msra.mxu0 %v82
  %527 = vmatprep.subr.mxu0 0.0
  %528 = vmatpush1.msra.mxu0 %v83
  %529 = vmatprep.subr.mxu0 0.0
  %530 = vmatpush1.msra.mxu0 %v84
  %531 = vmatprep.subr.mxu0 0.0
  %532 = vmatpush1.msra.mxu0 %v85
  %533 = vmatprep.subr.mxu0 0.0
  %534 = vmatpush1.msra.mxu0 0.0
  %535 = vmatprep.subr.mxu0 0.0
  %536 = vmatpush1.msra.mxu0 0.0
  %537 = vmatprep.subr.mxu0 0.0
  %538 = vmatpush1.msra.mxu0 0.0
  %539 = vmatprep.subr.mxu0 0.0
  %540 = vmatpush1.msra.mxu0 0.0
  %541 = vmatprep.subr.mxu0 0.0
  %542 = vmatpush1.msra.mxu0 0.0
  %543 = vmatprep.subr.mxu0 0.0
  %544 = vmatpush1.msra.mxu0 0.0
  %545 = vmatprep.subr.mxu0 0.0
  %546 = vmatpush1.msra.mxu0 0.0
  %547 = vmatprep.subr.mxu0 0.0
  %548 = vmatpush1.msra.mxu0 0.0
  %549 = vmatprep.subr.mxu0 0.0
  %550 = vmatpush1.msra.mxu0 0.0
  %551 = vmatprep.subr.mxu0 0.0
  %552 = vmatpush1.msra.mxu0 0.0
  %553 = vmatprep.subr.mxu0 0.0
  %554 = vmatpush1.msra.mxu0 0.0
  %555 = vmatprep.subr.mxu0 0.0
  %556 = vmatpush1.msra.mxu0 0.0
  %557 = vmatprep.subr.mxu0 0.0
  %558 = vmatpush1.msra.mxu0 0.0
  %559 = vmatprep.subr.mxu0 0.0
  %560 = vmatpush1.msra.mxu0 0.0
  %561 = vmatprep.subr.mxu0 0.0
  %562 = vmatpush1.msra.mxu0 0.0
  %563 = vmatprep.subr.mxu0 0.0
  %564 = vmatpush1.msra.mxu0 0.0
  %565 = vmatprep.subr.mxu0 0.0
  %566 = vmatpush1.msra.mxu0 0.0
  %567 = vmatprep.subr.mxu0 0.0
  %568 = vmatpush1.msra.mxu0 0.0
  %569 = vmatprep.subr.mxu0 0.0
  %570 = vmatpush1.msra.mxu0 0.0
  %571 = vmatprep.subr.mxu0 0.0
  %572 = vmatpush1.msra.mxu0 0.0
  %573 = vmatprep.subr.mxu0 0.0
  %574 = vmatpush1.msra.mxu0 0.0
  %575 = vmatprep.subr.mxu0 0.0
  %576 = vmatpush1.msra.mxu0 0.0
  %577 = vmatprep.subr.mxu0 0.0
  %578 = vmatpush1.msra.mxu0 0.0
  %579 = vmatprep.subr.mxu0 0.0
  %580 = vmatpush1.msra.mxu0 0.0
  %581 = vmatprep.subr.mxu0 0.0
  %582 = vmatpush1.msra.mxu0 0.0
  %583 = vmatprep.subr.mxu0 0.0
  %584 = vmatpush1.msra.mxu0 0.0
  %585 = vmatprep.subr.mxu0 0.0
  %586 = vmatpush1.msra.mxu0 0.0
  %587 = vmatprep.subr.mxu0 0.0
  %588 = vmatpush1.msra.mxu0 0.0
  %589 = vmatprep.mubr.f32.mxu0 0.0
  %590 = vmatmul.mubr.f32.gmra.mrb[0].mxu0 %v453
  %v591 = vpop.f32.mrb[0].mxu0
  %v592 = vadd.f32 0.0, %v591
  %v593 = vpop.f32.mrb[0].mxu0
  %594 = vdwg.mxu0
  %v595 = vlaneseq
  %v596 = vshrl.u32 %v595, 7
  %v597 = vsub.s32 1, %v596
  %v598 = vrot.slane %v95, %v597
  %599 = vmatprep.subr.mxu0 0.0
  %600 = vmatpush1.msra.mxu0 %v91
  %601 = vmatprep.subr.mxu0 0.0
  %602 = vmatpush1.msra.mxu0 %v92
  %603 = vmatprep.subr.mxu0 0.0
  %604 = vmatpush1.msra.mxu0 %v93
  %605 = vmatprep.subr.mxu0 0.0
  %606 = vmatpush1.msra.mxu0 %v94
  %607 = vmatprep.subr.mxu0 0.0
  %608 = vmatpush1.msra.mxu0 0.0
  %609 = vmatprep.subr.mxu0 0.0
  %610 = vmatpush1.msra.mxu0 0.0
  %611 = vmatprep.subr.mxu0 0.0
  %612 = vmatpush1.msra.mxu0 0.0
  %613 = vmatprep.subr.mxu0 0.0
  %614 = vmatpush1.msra.mxu0 0.0
  %615 = vmatprep.subr.mxu0 0.0
  %616 = vmatpush1.msra.mxu0 0.0
  %617 = vmatprep.subr.mxu0 0.0
  %618 = vmatpush1.msra.mxu0 0.0
  %619 = vmatprep.subr.mxu0 0.0
  %620 = vmatpush1.msra.mxu0 0.0
  %621 = vmatprep.subr.mxu0 0.0
  %622 = vmatpush1.msra.mxu0 0.0
  %623 = vmatprep.subr.mxu0 0.0
  %624 = vmatpush1.msra.mxu0 0.0
  %625 = vmatprep.subr.mxu0 0.0
  %626 = vmatpush1.msra.mxu0 0.0
  %627 = vmatprep.subr.mxu0 0.0
  %628 = vmatpush1.msra.mxu0 0.0
  %629 = vmatprep.subr.mxu0 0.0
  %630 = vmatpush1.msra.mxu0 0.0
  %631 = vmatprep.subr.mxu0 0.0
  %632 = vmatpush1.msra.mxu0 0.0
  %633 = vmatprep.subr.mxu0 0.0
  %634 = vmatpush1.msra.mxu0 0.0
  %635 = vmatprep.subr.mxu0 0.0
  %636 = vmatpush1.msra.mxu0 0.0
  %637 = vmatprep.subr.mxu0 0.0
  %638 = vmatpush1.msra.mxu0 0.0
  %639 = vmatprep.subr.mxu0 0.0
  %640 = vmatpush1.msra.mxu0 0.0
  %641 = vmatprep.subr.mxu0 0.0
  %642 = vmatpush1.msra.mxu0 0.0
  %643 = vmatprep.subr.mxu0 0.0
  %644 = vmatpush1.msra.mxu0 0.0
  %645 = vmatprep.subr.mxu0 0.0
  %646 = vmatpush1.msra.mxu0 0.0
  %647 = vmatprep.subr.mxu0 0.0
  %648 = vmatpush1.msra.mxu0 0.0
  %649 = vmatprep.subr.mxu0 0.0
  %650 = vmatpush1.msra.mxu0 0.0
  %651 = vmatprep.subr.mxu0 0.0
  %652 = vmatpush1.msra.mxu0 0.0
  %653 = vmatprep.subr.mxu0 0.0
  %654 = vmatpush1.msra.mxu0 0.0
  %655 = vmatprep.subr.mxu0 0.0
  %656 = vmatpush1.msra.mxu0 0.0
  %657 = vmatprep.subr.mxu0 0.0
  %658 = vmatpush1.msra.mxu0 0.0
  %659 = vmatprep.subr.mxu0 0.0
  %660 = vmatpush1.msra.mxu0 0.0
  %661 = vmatprep.subr.mxu0 0.0
  %662 = vmatpush1.msra.mxu0 0.0
  %663 = vmatprep.mubr.f32.mxu0 0.0
  %664 = vmatmul.mubr.f32.gmra.mrb[0].mxu0 %v453
  %v665 = vpop.f32.mrb[0].mxu0
  %v666 = vadd.f32 %v598, %v665
  %v667 = vpop.f32.mrb[0].mxu0
  %668 = vdwg.mxu0
  %v669 = vadd.f32 %v192, %v522
  %v670 = vtanh.pop %v669
  %v671 = vmul.f32 %v670, 0.5
  %v672 = vadd.f32 %v671, 0.5
  %v673 = vadd.f32 %v301, %v592
  %v674 = vtanh.pop %v673
  %v675 = vmul.f32 %v674, 0.5
  %v676 = vadd.f32 %v675, 0.5
  %v677 = vmul.f32 %v672, %v666
  %v678 = vadd.f32 %v410, %v677
  %v679 = vtanh.pop %v678
  %v680 = vsub.f32 0.0, %v679
  %v681 = vmul.f32 %v676, %v680
  %v682 = vadd.f32 %v679, %v681
  %vm683 = vcmp.gt.s32.totalorder %v450, 0
  %v684 = vsel %vm683, %v682, 0.0
  %685 = vst.msk [vmem:[%s2] sm:$0xff] %vm451, %v684
  %v687 = vsel %vm451, %v684, 0
  %689 = vmatprep.subr.mxu0 0.0
  %690 = vmatpush1.msra.mxu0 %v73
  %691 = vmatprep.subr.mxu0 0.0
  %692 = vmatpush1.msra.mxu0 %v74
  %693 = vmatprep.subr.mxu0 0.0
  %694 = vmatpush1.msra.mxu0 %v75
  %695 = vmatprep.subr.mxu0 0.0
  %696 = vmatpush1.msra.mxu0 %v76
  %697 = vmatprep.subr.mxu0 0.0
  %698 = vmatpush1.msra.mxu0 0.0
  %699 = vmatprep.subr.mxu0 0.0
  %700 = vmatpush1.msra.mxu0 0.0
  %701 = vmatprep.subr.mxu0 0.0
  %702 = vmatpush1.msra.mxu0 0.0
  %703 = vmatprep.subr.mxu0 0.0
  %704 = vmatpush1.msra.mxu0 0.0
  %705 = vmatprep.subr.mxu0 0.0
  %706 = vmatpush1.msra.mxu0 0.0
  %707 = vmatprep.subr.mxu0 0.0
  %708 = vmatpush1.msra.mxu0 0.0
  %709 = vmatprep.subr.mxu0 0.0
  %710 = vmatpush1.msra.mxu0 0.0
  %711 = vmatprep.subr.mxu0 0.0
  %712 = vmatpush1.msra.mxu0 0.0
  %713 = vmatprep.subr.mxu0 0.0
  %714 = vmatpush1.msra.mxu0 0.0
  %715 = vmatprep.subr.mxu0 0.0
  %716 = vmatpush1.msra.mxu0 0.0
  %717 = vmatprep.subr.mxu0 0.0
  %718 = vmatpush1.msra.mxu0 0.0
  %719 = vmatprep.subr.mxu0 0.0
  %720 = vmatpush1.msra.mxu0 0.0
  %721 = vmatprep.subr.mxu0 0.0
  %722 = vmatpush1.msra.mxu0 0.0
  %723 = vmatprep.subr.mxu0 0.0
  %724 = vmatpush1.msra.mxu0 0.0
  %725 = vmatprep.subr.mxu0 0.0
  %726 = vmatpush1.msra.mxu0 0.0
  %727 = vmatprep.subr.mxu0 0.0
  %728 = vmatpush1.msra.mxu0 0.0
  %729 = vmatprep.subr.mxu0 0.0
  %730 = vmatpush1.msra.mxu0 0.0
  %731 = vmatprep.subr.mxu0 0.0
  %732 = vmatpush1.msra.mxu0 0.0
  %733 = vmatprep.subr.mxu0 0.0
  %734 = vmatpush1.msra.mxu0 0.0
  %735 = vmatprep.subr.mxu0 0.0
  %736 = vmatpush1.msra.mxu0 0.0
  %737 = vmatprep.subr.mxu0 0.0
  %738 = vmatpush1.msra.mxu0 0.0
  %739 = vmatprep.subr.mxu0 0.0
  %740 = vmatpush1.msra.mxu0 0.0
  %741 = vmatprep.subr.mxu0 0.0
  %742 = vmatpush1.msra.mxu0 0.0
  %743 = vmatprep.subr.mxu0 0.0
  %744 = vmatpush1.msra.mxu0 0.0
  %745 = vmatprep.subr.mxu0 0.0
  %746 = vmatpush1.msra.mxu0 0.0
  %747 = vmatprep.subr.mxu0 0.0
  %748 = vmatpush1.msra.mxu0 0.0
  %749 = vmatprep.subr.mxu0 0.0
  %750 = vmatpush1.msra.mxu0 0.0
  %751 = vmatprep.subr.mxu0 0.0
  %752 = vmatpush1.msra.mxu0 0.0
  %753 = vmatprep.mubr.f32.mxu0 0.0
  %754 = vmatmul.mubr.f32.gmra.mrb[0].mxu0 %v687
  %v755 = vpop.f32.mrb[0].mxu0
  %v756 = vadd.f32 0.0, %v755
  %v757 = vpop.f32.mrb[0].mxu0
  %758 = vdwg.mxu0
  %759 = vmatprep.subr.mxu0 0.0
  %760 = vmatpush1.msra.mxu0 %v82
  %761 = vmatprep.subr.mxu0 0.0
  %762 = vmatpush1.msra.mxu0 %v83
  %763 = vmatprep.subr.mxu0 0.0
  %764 = vmatpush1.msra.mxu0 %v84
  %765 = vmatprep.subr.mxu0 0.0
  %766 = vmatpush1.msra.mxu0 %v85
  %767 = vmatprep.subr.mxu0 0.0
  %768 = vmatpush1.msra.mxu0 0.0
  %769 = vmatprep.subr.mxu0 0.0
  %770 = vmatpush1.msra.mxu0 0.0
  %771 = vmatprep.subr.mxu0 0.0
  %772 = vmatpush1.msra.mxu0 0.0
  %773 = vmatprep.subr.mxu0 0.0
  %774 = vmatpush1.msra.mxu0 0.0
  %775 = vmatprep.subr.mxu0 0.0
  %776 = vmatpush1.msra.mxu0 0.0
  %777 = vmatprep.subr.mxu0 0.0
  %778 = vmatpush1.msra.mxu0 0.0
  %779 = vmatprep.subr.mxu0 0.0
  %780 = vmatpush1.msra.mxu0 0.0
  %781 = vmatprep.subr.mxu0 0.0
  %782 = vmatpush1.msra.mxu0 0.0
  %783 = vmatprep.subr.mxu0 0.0
  %784 = vmatpush1.msra.mxu0 0.0
  %785 = vmatprep.subr.mxu0 0.0
  %786 = vmatpush1.msra.mxu0 0.0
  %787 = vmatprep.subr.mxu0 0.0
  %788 = vmatpush1.msra.mxu0 0.0
  %789 = vmatprep.subr.mxu0 0.0
  %790 = vmatpush1.msra.mxu0 0.0
  %791 = vmatprep.subr.mxu0 0.0
  %792 = vmatpush1.msra.mxu0 0.0
  %793 = vmatprep.subr.mxu0 0.0
  %794 = vmatpush1.msra.mxu0 0.0
  %795 = vmatprep.subr.mxu0 0.0
  %796 = vmatpush1.msra.mxu0 0.0
  %797 = vmatprep.subr.mxu0 0.0
  %798 = vmatpush1.msra.mxu0 0.0
  %799 = vmatprep.subr.mxu0 0.0
  %800 = vmatpush1.msra.mxu0 0.0
  %801 = vmatprep.subr.mxu0 0.0
  %802 = vmatpush1.msra.mxu0 0.0
  %803 = vmatprep.subr.mxu0 0.0
  %804 = vmatpush1.msra.mxu0 0.0
  %805 = vmatprep.subr.mxu0 0.0
  %806 = vmatpush1.msra.mxu0 0.0
  %807 = vmatprep.subr.mxu0 0.0
  %808 = vmatpush1.msra.mxu0 0.0
  %809 = vmatprep.subr.mxu0 0.0
  %810 = vmatpush1.msra.mxu0 0.0
  %811 = vmatprep.subr.mxu0 0.0
  %812 = vmatpush1.msra.mxu0 0.0
  %813 = vmatprep.subr.mxu0 0.0
  %814 = vmatpush1.msra.mxu0 0.0
  %815 = vmatprep.subr.mxu0 0.0
  %816 = vmatpush1.msra.mxu0 0.0
  %817 = vmatprep.subr.mxu0 0.0
  %818 = vmatpush1.msra.mxu0 0.0
  %819 = vmatprep.subr.mxu0 0.0
  %820 = vmatpush1.msra.mxu0 0.0
  %821 = vmatprep.subr.mxu0 0.0
  %822 = vmatpush1.msra.mxu0 0.0
  %823 = vmatprep.mubr.f32.mxu0 0.0
  %824 = vmatmul.mubr.f32.gmra.mrb[0].mxu0 %v687
  %v825 = vpop.f32.mrb[0].mxu0
  %v826 = vadd.f32 0.0, %v825
  %v827 = vpop.f32.mrb[0].mxu0
  %828 = vdwg.mxu0
  %829 = vmatprep.subr.mxu0 0.0
  %830 = vmatpush1.msra.mxu0 %v91
  %831 = vmatprep.subr.mxu0 0.0
  %832 = vmatpush1.msra.mxu0 %v92
  %833 = vmatprep.subr.mxu0 0.0
  %834 = vmatpush1.msra.mxu0 %v93
  %835 = vmatprep.subr.mxu0 0.0
  %836 = vmatpush1.msra.mxu0 %v94
  %837 = vmatprep.subr.mxu0 0.0
  %838 = vmatpush1.msra.mxu0 0.0
  %839 = vmatprep.subr.mxu0 0.0
  %840 = vmatpush1.msra.mxu0 0.0
  %841 = vmatprep.subr.mxu0 0.0
  %842 = vmatpush1.msra.mxu0 0.0
  %843 = vmatprep.subr.mxu0 0.0
  %844 = vmatpush1.msra.mxu0 0.0
  %845 = vmatprep.subr.mxu0 0.0
  %846 = vmatpush1.msra.mxu0 0.0
  %847 = vmatprep.subr.mxu0 0.0
  %848 = vmatpush1.msra.mxu0 0.0
  %849 = vmatprep.subr.mxu0 0.0
  %850 = vmatpush1.msra.mxu0 0.0
  %851 = vmatprep.subr.mxu0 0.0
  %852 = vmatpush1.msra.mxu0 0.0
  %853 = vmatprep.subr.mxu0 0.0
  %854 = vmatpush1.msra.mxu0 0.0
  %855 = vmatprep.subr.mxu0 0.0
  %856 = vmatpush1.msra.mxu0 0.0
  %857 = vmatprep.subr.mxu0 0.0
  %858 = vmatpush1.msra.mxu0 0.0
  %859 = vmatprep.subr.mxu0 0.0
  %860 = vmatpush1.msra.mxu0 0.0
  %861 = vmatprep.subr.mxu0 0.0
  %862 = vmatpush1.msra.mxu0 0.0
  %863 = vmatprep.subr.mxu0 0.0
  %864 = vmatpush1.msra.mxu0 0.0
  %865 = vmatprep.subr.mxu0 0.0
  %866 = vmatpush1.msra.mxu0 0.0
  %867 = vmatprep.subr.mxu0 0.0
  %868 = vmatpush1.msra.mxu0 0.0
  %869 = vmatprep.subr.mxu0 0.0
  %870 = vmatpush1.msra.mxu0 0.0
  %871 = vmatprep.subr.mxu0 0.0
  %872 = vmatpush1.msra.mxu0 0.0
  %873 = vmatprep.subr.mxu0 0.0
  %874 = vmatpush1.msra.mxu0 0.0
  %875 = vmatprep.subr.mxu0 0.0
  %876 = vmatpush1.msra.mxu0 0.0
  %877 = vmatprep.subr.mxu0 0.0
  %878 = vmatpush1.msra.mxu0 0.0
  %879 = vmatprep.subr.mxu0 0.0
  %880 = vmatpush1.msra.mxu0 0.0
  %881 = vmatprep.subr.mxu0 0.0
  %882 = vmatpush1.msra.mxu0 0.0
  %883 = vmatprep.subr.mxu0 0.0
  %884 = vmatpush1.msra.mxu0 0.0
  %885 = vmatprep.subr.mxu0 0.0
  %886 = vmatpush1.msra.mxu0 0.0
  %887 = vmatprep.subr.mxu0 0.0
  %888 = vmatpush1.msra.mxu0 0.0
  %889 = vmatprep.subr.mxu0 0.0
  %890 = vmatpush1.msra.mxu0 0.0
  %891 = vmatprep.subr.mxu0 0.0
  %892 = vmatpush1.msra.mxu0 0.0
  %893 = vmatprep.mubr.f32.mxu0 0.0
  %894 = vmatmul.mubr.f32.gmra.mrb[0].mxu0 %v687
  %v895 = vpop.f32.mrb[0].mxu0
  %v896 = vadd.f32 %v598, %v895
  %v897 = vpop.f32.mrb[0].mxu0
  %898 = vdwg.mxu0
  %v899 = vadd.f32 %v197, %v756
  %v900 = vtanh.pop %v899
  %v901 = vmul.f32 %v900, 0.5
  %v902 = vadd.f32 %v901, 0.5
  %v903 = vadd.f32 %v306, %v826
  %v904 = vtanh.pop %v903
  %v905 = vmul.f32 %v904, 0.5
  %v906 = vadd.f32 %v905, 0.5
  %v907 = vmul.f32 %v902, %v896
  %v908 = vadd.f32 %v415, %v907
  %v909 = vtanh.pop %v908
  %v910 = vsub.f32 %v684, %v909
  %v911 = vmul.f32 %v906, %v910
  %v912 = vadd.f32 %v909, %v911
  %vm913 = vcmp.gt.s32.totalorder %v450, 1
  %v914 = vsel %vm913, %v912, %v684
  %v915 = vsel %vm913, %v912, 0.0
  %917 = vrot.lane.b32.xlu0 %v915, 32
  %v918 = vpop.permute.xlu0 %917
  %vm920 = vcmask 523520
  %921 = vst.msk [vmem:[%s2] sm:$0xff] %vm920, %v918
  %v923 = vsel %vm451, %v914, 0
  %925 = vmatprep.subr.mxu0 0.0
  %926 = vmatpush1.msra.mxu0 %v73
  %927 = vmatprep.subr.mxu0 0.0
  %928 = vmatpush1.msra.mxu0 %v74
  %929 = vmatprep.subr.mxu0 0.0
  %930 = vmatpush1.msra.mxu0 %v75
  %931 = vmatprep.subr.mxu0 0.0
  %932 = vmatpush1.msra.mxu0 %v76
  %933 = vmatprep.subr.mxu0 0.0
  %934 = vmatpush1.msra.mxu0 0.0
  %935 = vmatprep.subr.mxu0 0.0
  %936 = vmatpush1.msra.mxu0 0.0
  %937 = vmatprep.subr.mxu0 0.0
  %938 = vmatpush1.msra.mxu0 0.0
  %939 = vmatprep.subr.mxu0 0.0
  %940 = vmatpush1.msra.mxu0 0.0
  %941 = vmatprep.subr.mxu0 0.0
  %942 = vmatpush1.msra.mxu0 0.0
  %943 = vmatprep.subr.mxu0 0.0
  %944 = vmatpush1.msra.mxu0 0.0
  %945 = vmatprep.subr.mxu0 0.0
  %946 = vmatpush1.msra.mxu0 0.0
  %947 = vmatprep.subr.mxu0 0.0
  %948 = vmatpush1.msra.mxu0 0.0
  %949 = vmatprep.subr.mxu0 0.0
  %950 = vmatpush1.msra.mxu0 0.0
  %951 = vmatprep.subr.mxu0 0.0
  %952 = vmatpush1.msra.mxu0 0.0
  %953 = vmatprep.subr.mxu0 0.0
  %954 = vmatpush1.msra.mxu0 0.0
  %955 = vmatprep.subr.mxu0 0.0
  %956 = vmatpush1.msra.mxu0 0.0
  %957 = vmatprep.subr.mxu0 0.0
  %958 = vmatpush1.msra.mxu0 0.0
  %959 = vmatprep.subr.mxu0 0.0
  %960 = vmatpush1.msra.mxu0 0.0
  %961 = vmatprep.subr.mxu0 0.0
  %962 = vmatpush1.msra.mxu0 0.0
  %963 = vmatprep.subr.mxu0 0.0
  %964 = vmatpush1.msra.mxu0 0.0
  %965 = vmatprep.subr.mxu0 0.0
  %966 = vmatpush1.msra.mxu0 0.0
  %967 = vmatprep.subr.mxu0 0.0
  %968 = vmatpush1.msra.mxu0 0.0
  %969 = vmatprep.subr.mxu0 0.0
  %970 = vmatpush1.msra.mxu0 0.0
  %971 = vmatprep.subr.mxu0 0.0
  %972 = vmatpush1.msra.mxu0 0.0
  %973 = vmatprep.subr.mxu0 0.0
  %974 = vmatpush1.msra.mxu0 0.0
  %975 = vmatprep.subr.mxu0 0.0
  %976 = vmatpush1.msra.mxu0 0.0
  %977 = vmatprep.subr.mxu0 0.0
  %978 = vmatpush1.msra.mxu0 0.0
  %979 = vmatprep.subr.mxu0 0.0
  %980 = vmatpush1.msra.mxu0 0.0
  %981 = vmatprep.subr.mxu0 0.0
  %982 = vmatpush1.msra.mxu0 0.0
  %983 = vmatprep.subr.mxu0 0.0
  %984 = vmatpush1.msra.mxu0 0.0
  %985 = vmatprep.subr.mxu0 0.0
  %986 = vmatpush1.msra.mxu0 0.0
  %987 = vmatprep.subr.mxu0 0.0
  %988 = vmatpush1.msra.mxu0 0.0
  %989 = vmatprep.mubr.f32.mxu0 0.0
  %990 = vmatmul.mubr.f32.gmra.mrb[0].mxu0 %v923
  %v991 = vpop.f32.mrb[0].mxu0
  %v992 = vadd.f32 0.0, %v991
  %v993 = vpop.f32.mrb[0].mxu0
  %994 = vdwg.mxu0
  %995 = vmatprep.subr.mxu0 0.0
  %996 = vmatpush1.msra.mxu0 %v82
  %997 = vmatprep.subr.mxu0 0.0
  %998 = vmatpush1.msra.mxu0 %v83
  %999 = vmatprep.subr.mxu0 0.0
  %1000 = vmatpush1.msra.mxu0 %v84
  %1001 = vmatprep.subr.mxu0 0.0
  %1002 = vmatpush1.msra.mxu0 %v85
  %1003 = vmatprep.subr.mxu0 0.0
  %1004 = vmatpush1.msra.mxu0 0.0
  %1005 = vmatprep.subr.mxu0 0.0
  %1006 = vmatpush1.msra.mxu0 0.0
  %1007 = vmatprep.subr.mxu0 0.0
  %1008 = vmatpush1.msra.mxu0 0.0
  %1009 = vmatprep.subr.mxu0 0.0
  %1010 = vmatpush1.msra.mxu0 0.0
  %1011 = vmatprep.subr.mxu0 0.0
  %1012 = vmatpush1.msra.mxu0 0.0
  %1013 = vmatprep.subr.mxu0 0.0
  %1014 = vmatpush1.msra.mxu0 0.0
  %1015 = vmatprep.subr.mxu0 0.0
  %1016 = vmatpush1.msra.mxu0 0.0
  %1017 = vmatprep.subr.mxu0 0.0
  %1018 = vmatpush1.msra.mxu0 0.0
  %1019 = vmatprep.subr.mxu0 0.0
  %1020 = vmatpush1.msra.mxu0 0.0
  %1021 = vmatprep.subr.mxu0 0.0
  %1022 = vmatpush1.msra.mxu0 0.0
  %1023 = vmatprep.subr.mxu0 0.0
  %1024 = vmatpush1.msra.mxu0 0.0
  %1025 = vmatprep.subr.mxu0 0.0
  %1026 = vmatpush1.msra.mxu0 0.0
  %1027 = vmatprep.subr.mxu0 0.0
  %1028 = vmatpush1.msra.mxu0 0.0
  %1029 = vmatprep.subr.mxu0 0.0
  %1030 = vmatpush1.msra.mxu0 0.0
  %1031 = vmatprep.subr.mxu0 0.0
  %1032 = vmatpush1.msra.mxu0 0.0
  %1033 = vmatprep.subr.mxu0 0.0
  %1034 = vmatpush1.msra.mxu0 0.0
  %1035 = vmatprep.subr.mxu0 0.0
  %1036 = vmatpush1.msra.mxu0 0.0
  %1037 = vmatprep.subr.mxu0 0.0
  %1038 = vmatpush1.msra.mxu0 0.0
  %1039 = vmatprep.subr.mxu0 0.0
  %1040 = vmatpush1.msra.mxu0 0.0
  %1041 = vmatprep.subr.mxu0 0.0
  %1042 = vmatpush1.msra.mxu0 0.0
  %1043 = vmatprep.subr.mxu0 0.0
  %1044 = vmatpush1.msra.mxu0 0.0
  %1045 = vmatprep.subr.mxu0 0.0
  %1046 = vmatpush1.msra.mxu0 0.0
  %1047 = vmatprep.subr.mxu0 0.0
  %1048 = vmatpush1.msra.mxu0 0.0
  %1049 = vmatprep.subr.mxu0 0.0
  %1050 = vmatpush1.msra.mxu0 0.0
  %1051 = vmatprep.subr.mxu0 0.0
  %1052 = vmatpush1.msra.mxu0 0.0
  %1053 = vmatprep.subr.mxu0 0.0
  %1054 = vmatpush1.msra.mxu0 0.0
  %1055 = vmatprep.subr.mxu0 0.0
  %1056 = vmatpush1.msra.mxu0 0.0
  %1057 = vmatprep.subr.mxu0 0.0
  %1058 = vmatpush1.msra.mxu0 0.0
  %1059 = vmatprep.mubr.f32.mxu0 0.0
  %1060 = vmatmul.mubr.f32.gmra.mrb[0].mxu0 %v923
  %v1061 = vpop.f32.mrb[0].mxu0
  %v1062 = vadd.f32 0.0, %v1061
  %v1063 = vpop.f32.mrb[0].mxu0
  %1064 = vdwg.mxu0
  %1065 = vmatprep.subr.mxu0 0.0
  %1066 = vmatpush1.msra.mxu0 %v91
  %1067 = vmatprep.subr.mxu0 0.0
  %1068 = vmatpush1.msra.mxu0 %v92
  %1069 = vmatprep.subr.mxu0 0.0
  %1070 = vmatpush1.msra.mxu0 %v93
  %1071 = vmatprep.subr.mxu0 0.0
  %1072 = vmatpush1.msra.mxu0 %v94
  %1073 = vmatprep.subr.mxu0 0.0
  %1074 = vmatpush1.msra.mxu0 0.0
  %1075 = vmatprep.subr.mxu0 0.0
  %1076 = vmatpush1.msra.mxu0 0.0
  %1077 = vmatprep.subr.mxu0 0.0
  %1078 = vmatpush1.msra.mxu0 0.0
  %1079 = vmatprep.subr.mxu0 0.0
  %1080 = vmatpush1.msra.mxu0 0.0
  %1081 = vmatprep.subr.mxu0 0.0
  %1082 = vmatpush1.msra.mxu0 0.0
  %1083 = vmatprep.subr.mxu0 0.0
  %1084 = vmatpush1.msra.mxu0 0.0
  %1085 = vmatprep.subr.mxu0 0.0
  %1086 = vmatpush1.msra.mxu0 0.0
  %1087 = vmatprep.subr.mxu0 0.0
  %1088 = vmatpush1.msra.mxu0 0.0
  %1089 = vmatprep.subr.mxu0 0.0
  %1090 = vmatpush1.msra.mxu0 0.0
  %1091 = vmatprep.subr.mxu0 0.0
  %1092 = vmatpush1.msra.mxu0 0.0
  %1093 = vmatprep.subr.mxu0 0.0
  %1094 = vmatpush1.msra.mxu0 0.0
  %1095 = vmatprep.subr.mxu0 0.0
  %1096 = vmatpush1.msra.mxu0 0.0
  %1097 = vmatprep.subr.mxu0 0.0
  %1098 = vmatpush1.msra.mxu0 0.0
  %1099 = vmatprep.subr.mxu0 0.0
  %1100 = vmatpush1.msra.mxu0 0.0
  %1101 = vmatprep.subr.mxu0 0.0
  %1102 = vmatpush1.msra.mxu0 0.0
  %1103 = vmatprep.subr.mxu0 0.0
  %1104 = vmatpush1.msra.mxu0 0.0
  %1105 = vmatprep.subr.mxu0 0.0
  %1106 = vmatpush1.msra.mxu0 0.0
  %1107 = vmatprep.subr.mxu0 0.0
  %1108 = vmatpush1.msra.mxu0 0.0
  %1109 = vmatprep.subr.mxu0 0.0
  %1110 = vmatpush1.msra.mxu0 0.0
  %1111 = vmatprep.subr.mxu0 0.0
  %1112 = vmatpush1.msra.mxu0 0.0
  %1113 = vmatprep.subr.mxu0 0.0
  %1114 = vmatpush1.msra.mxu0 0.0
  %1115 = vmatprep.subr.mxu0 0.0
  %1116 = vmatpush1.msra.mxu0 0.0
  %1117 = vmatprep.subr.mxu0 0.0
  %1118 = vmatpush1.msra.mxu0 0.0
  %1119 = vmatprep.subr.mxu0 0.0
  %1120 = vmatpush1.msra.mxu0 0.0
  %1121 = vmatprep.subr.mxu0 0.0
  %1122 = vmatpush1.msra.mxu0 0.0
  %1123 = vmatprep.subr.mxu0 0.0
  %1124 = vmatpush1.msra.mxu0 0.0
  %1125 = vmatprep.subr.mxu0 0.0
  %1126 = vmatpush1.msra.mxu0 0.0
  %1127 = vmatprep.subr.mxu0 0.0
  %1128 = vmatpush1.msra.mxu0 0.0
  %1129 = vmatprep.mubr.f32.mxu0 0.0
  %1130 = vmatmul.mubr.f32.gmra.mrb[0].mxu0 %v923
  %v1131 = vpop.f32.mrb[0].mxu0
  %v1132 = vadd.f32 %v598, %v1131
  %v1133 = vpop.f32.mrb[0].mxu0
  %1134 = vdwg.mxu0
  %v1135 = vadd.f32 %v202, %v992
  %v1136 = vtanh.pop %v1135
  %v1137 = vmul.f32 %v1136, 0.5
  %v1138 = vadd.f32 %v1137, 0.5
  %v1139 = vadd.f32 %v311, %v1062
  %v1140 = vtanh.pop %v1139
  %v1141 = vmul.f32 %v1140, 0.5
  %v1142 = vadd.f32 %v1141, 0.5
  %v1143 = vmul.f32 %v1138, %v1132
  %v1144 = vadd.f32 %v420, %v1143
  %v1145 = vtanh.pop %v1144
  %v1146 = vsub.f32 %v914, %v1145
  %v1147 = vmul.f32 %v1142, %v1146
  %v1148 = vadd.f32 %v1145, %v1147
  %vm1149 = vcmp.gt.s32.totalorder %v450, 2
  %v1150 = vsel %vm1149, %v1148, %v914
  %v1151 = vsel %vm1149, %v1148, 0.0
  %1153 = vrot.lane.b32.xlu0 %v1151, 64
  %v1154 = vpop.permute.xlu0 %1153
  %vm1156 = vcmask 785920
  %1157 = vst.msk [vmem:[%s2] sm:$0xff] %vm1156, %v1154
  %v1159 = vsel %vm451, %v1150, 0
  %1161 = vmatprep.subr.mxu0 0.0
  %1162 = vmatpush1.msra.mxu0 %v73
  %1163 = vmatprep.subr.mxu0 0.0
  %1164 = vmatpush1.msra.mxu0 %v74
  %1165 = vmatprep.subr.mxu0 0.0
  %1166 = vmatpush1.msra.mxu0 %v75
  %1167 = vmatprep.subr.mxu0 0.0
  %1168 = vmatpush1.msra.mxu0 %v76
  %1169 = vmatprep.subr.mxu0 0.0
  %1170 = vmatpush1.msra.mxu0 0.0
  %1171 = vmatprep.subr.mxu0 0.0
  %1172 = vmatpush1.msra.mxu0 0.0
  %1173 = vmatprep.subr.mxu0 0.0
  %1174 = vmatpush1.msra.mxu0 0.0
  %1175 = vmatprep.subr.mxu0 0.0
  %1176 = vmatpush1.msra.mxu0 0.0
  %1177 = vmatprep.subr.mxu0 0.0
  %1178 = vmatpush1.msra.mxu0 0.0
  %1179 = vmatprep.subr.mxu0 0.0
  %1180 = vmatpush1.msra.mxu0 0.0
  %1181 = vmatprep.subr.mxu0 0.0
  %1182 = vmatpush1.msra.mxu0 0.0
  %1183 = vmatprep.subr.mxu0 0.0
  %1184 = vmatpush1.msra.mxu0 0.0
  %1185 = vmatprep.subr.mxu0 0.0
  %1186 = vmatpush1.msra.mxu0 0.0
  %1187 = vmatprep.subr.mxu0 0.0
  %1188 = vmatpush1.msra.mxu0 0.0
  %1189 = vmatprep.subr.mxu0 0.0
  %1190 = vmatpush1.msra.mxu0 0.0
  %1191 = vmatprep.subr.mxu0 0.0
  %1192 = vmatpush1.msra.mxu0 0.0
  %1193 = vmatprep.subr.mxu0 0.0
  %1194 = vmatpush1.msra.mxu0 0.0
  %1195 = vmatprep.subr.mxu0 0.0
  %1196 = vmatpush1.msra.mxu0 0.0
  %1197 = vmatprep.subr.mxu0 0.0
  %1198 = vmatpush1.msra.mxu0 0.0
  %1199 = vmatprep.subr.mxu0 0.0
  %1200 = vmatpush1.msra.mxu0 0.0
  %1201 = vmatprep.subr.mxu0 0.0
  %1202 = vmatpush1.msra.mxu0 0.0
  %1203 = vmatprep.subr.mxu0 0.0
  %1204 = vmatpush1.msra.mxu0 0.0
  %1205 = vmatprep.subr.mxu0 0.0
  %1206 = vmatpush1.msra.mxu0 0.0
  %1207 = vmatprep.subr.mxu0 0.0
  %1208 = vmatpush1.msra.mxu0 0.0
  %1209 = vmatprep.subr.mxu0 0.0
  %1210 = vmatpush1.msra.mxu0 0.0
  %1211 = vmatprep.subr.mxu0 0.0
  %1212 = vmatpush1.msra.mxu0 0.0
  %1213 = vmatprep.subr.mxu0 0.0
  %1214 = vmatpush1.msra.mxu0 0.0
  %1215 = vmatprep.subr.mxu0 0.0
  %1216 = vmatpush1.msra.mxu0 0.0
  %1217 = vmatprep.subr.mxu0 0.0
  %1218 = vmatpush1.msra.mxu0 0.0
  %1219 = vmatprep.subr.mxu0 0.0
  %1220 = vmatpush1.msra.mxu0 0.0
  %1221 = vmatprep.subr.mxu0 0.0
  %1222 = vmatpush1.msra.mxu0 0.0
  %1223 = vmatprep.subr.mxu0 0.0
  %1224 = vmatpush1.msra.mxu0 0.0
  %1225 = vmatprep.mubr.f32.mxu0 0.0
  %1226 = vmatmul.mubr.f32.gmra.mrb[0].mxu0 %v1159
  %v1227 = vpop.f32.mrb[0].mxu0
  %v1228 = vadd.f32 0.0, %v1227
  %v1229 = vpop.f32.mrb[0].mxu0
  %1230 = vdwg.mxu0
  %1231 = vmatprep.subr.mxu0 0.0
  %1232 = vmatpush1.msra.mxu0 %v82
  %1233 = vmatprep.subr.mxu0 0.0
  %1234 = vmatpush1.msra.mxu0 %v83
  %1235 = vmatprep.subr.mxu0 0.0
  %1236 = vmatpush1.msra.mxu0 %v84
  %1237 = vmatprep.subr.mxu0 0.0
  %1238 = vmatpush1.msra.mxu0 %v85
  %1239 = vmatprep.subr.mxu0 0.0
  %1240 = vmatpush1.msra.mxu0 0.0
  %1241 = vmatprep.subr.mxu0 0.0
  %1242 = vmatpush1.msra.mxu0 0.0
  %1243 = vmatprep.subr.mxu0 0.0
  %1244 = vmatpush1.msra.mxu0 0.0
  %1245 = vmatprep.subr.mxu0 0.0
  %1246 = vmatpush1.msra.mxu0 0.0
  %1247 = vmatprep.subr.mxu0 0.0
  %1248 = vmatpush1.msra.mxu0 0.0
  %1249 = vmatprep.subr.mxu0 0.0
  %1250 = vmatpush1.msra.mxu0 0.0
  %1251 = vmatprep.subr.mxu0 0.0
  %1252 = vmatpush1.msra.mxu0 0.0
  %1253 = vmatprep.subr.mxu0 0.0
  %1254 = vmatpush1.msra.mxu0 0.0
  %1255 = vmatprep.subr.mxu0 0.0
  %1256 = vmatpush1.msra.mxu0 0.0
  %1257 = vmatprep.subr.mxu0 0.0
  %1258 = vmatpush1.msra.mxu0 0.0
  %1259 = vmatprep.subr.mxu0 0.0
  %1260 = vmatpush1.msra.mxu0 0.0
  %1261 = vmatprep.subr.mxu0 0.0
  %1262 = vmatpush1.msra.mxu0 0.0
  %1263 = vmatprep.subr.mxu0 0.0
  %1264 = vmatpush1.msra.mxu0 0.0
  %1265 = vmatprep.subr.mxu0 0.0
  %1266 = vmatpush1.msra.mxu0 0.0
  %1267 = vmatprep.subr.mxu0 0.0
  %1268 = vmatpush1.msra.mxu0 0.0
  %1269 = vmatprep.subr.mxu0 0.0
  %1270 = vmatpush1.msra.mxu0 0.0
  %1271 = vmatprep.subr.mxu0 0.0
  %1272 = vmatpush1.msra.mxu0 0.0
  %1273 = vmatprep.subr.mxu0 0.0
  %1274 = vmatpush1.msra.mxu0 0.0
  %1275 = vmatprep.subr.mxu0 0.0
  %1276 = vmatpush1.msra.mxu0 0.0
  %1277 = vmatprep.subr.mxu0 0.0
  %1278 = vmatpush1.msra.mxu0 0.0
  %1279 = vmatprep.subr.mxu0 0.0
  %1280 = vmatpush1.msra.mxu0 0.0
  %1281 = vmatprep.subr.mxu0 0.0
  %1282 = vmatpush1.msra.mxu0 0.0
  %1283 = vmatprep.subr.mxu0 0.0
  %1284 = vmatpush1.msra.mxu0 0.0
  %1285 = vmatprep.subr.mxu0 0.0
  %1286 = vmatpush1.msra.mxu0 0.0
  %1287 = vmatprep.subr.mxu0 0.0
  %1288 = vmatpush1.msra.mxu0 0.0
  %1289 = vmatprep.subr.mxu0 0.0
  %1290 = vmatpush1.msra.mxu0 0.0
  %1291 = vmatprep.subr.mxu0 0.0
  %1292 = vmatpush1.msra.mxu0 0.0
  %1293 = vmatprep.subr.mxu0 0.0
  %1294 = vmatpush1.msra.mxu0 0.0
  %1295 = vmatprep.mubr.f32.mxu0 0.0
  %1296 = vmatmul.mubr.f32.gmra.mrb[0].mxu0 %v1159
  %v1297 = vpop.f32.mrb[0].mxu0
  %v1298 = vadd.f32 0.0, %v1297
  %v1299 = vpop.f32.mrb[0].mxu0
  %1300 = vdwg.mxu0
  %1301 = vmatprep.subr.mxu0 0.0
  %1302 = vmatpush1.msra.mxu0 %v91
  %1303 = vmatprep.subr.mxu0 0.0
  %1304 = vmatpush1.msra.mxu0 %v92
  %1305 = vmatprep.subr.mxu0 0.0
  %1306 = vmatpush1.msra.mxu0 %v93
  %1307 = vmatprep.subr.mxu0 0.0
  %1308 = vmatpush1.msra.mxu0 %v94
  %1309 = vmatprep.subr.mxu0 0.0
  %1310 = vmatpush1.msra.mxu0 0.0
  %1311 = vmatprep.subr.mxu0 0.0
  %1312 = vmatpush1.msra.mxu0 0.0
  %1313 = vmatprep.subr.mxu0 0.0
  %1314 = vmatpush1.msra.mxu0 0.0
  %1315 = vmatprep.subr.mxu0 0.0
  %1316 = vmatpush1.msra.mxu0 0.0
  %1317 = vmatprep.subr.mxu0 0.0
  %1318 = vmatpush1.msra.mxu0 0.0
  %1319 = vmatprep.subr.mxu0 0.0
  %1320 = vmatpush1.msra.mxu0 0.0
  %1321 = vmatprep.subr.mxu0 0.0
  %1322 = vmatpush1.msra.mxu0 0.0
  %1323 = vmatprep.subr.mxu0 0.0
  %1324 = vmatpush1.msra.mxu0 0.0
  %1325 = vmatprep.subr.mxu0 0.0
  %1326 = vmatpush1.msra.mxu0 0.0
  %1327 = vmatprep.subr.mxu0 0.0
  %1328 = vmatpush1.msra.mxu0 0.0
  %1329 = vmatprep.subr.mxu0 0.0
  %1330 = vmatpush1.msra.mxu0 0.0
  %1331 = vmatprep.subr.mxu0 0.0
  %1332 = vmatpush1.msra.mxu0 0.0
  %1333 = vmatprep.subr.mxu0 0.0
  %1334 = vmatpush1.msra.mxu0 0.0
  %1335 = vmatprep.subr.mxu0 0.0
  %1336 = vmatpush1.msra.mxu0 0.0
  %1337 = vmatprep.subr.mxu0 0.0
  %1338 = vmatpush1.msra.mxu0 0.0
  %1339 = vmatprep.subr.mxu0 0.0
  %1340 = vmatpush1.msra.mxu0 0.0
  %1341 = vmatprep.subr.mxu0 0.0
  %1342 = vmatpush1.msra.mxu0 0.0
  %1343 = vmatprep.subr.mxu0 0.0
  %1344 = vmatpush1.msra.mxu0 0.0
  %1345 = vmatprep.subr.mxu0 0.0
  %1346 = vmatpush1.msra.mxu0 0.0
  %1347 = vmatprep.subr.mxu0 0.0
  %1348 = vmatpush1.msra.mxu0 0.0
  %1349 = vmatprep.subr.mxu0 0.0
  %1350 = vmatpush1.msra.mxu0 0.0
  %1351 = vmatprep.subr.mxu0 0.0
  %1352 = vmatpush1.msra.mxu0 0.0
  %1353 = vmatprep.subr.mxu0 0.0
  %1354 = vmatpush1.msra.mxu0 0.0
  %1355 = vmatprep.subr.mxu0 0.0
  %1356 = vmatpush1.msra.mxu0 0.0
  %1357 = vmatprep.subr.mxu0 0.0
  %1358 = vmatpush1.msra.mxu0 0.0
  %1359 = vmatprep.subr.mxu0 0.0
  %1360 = vmatpush1.msra.mxu0 0.0
  %1361 = vmatprep.subr.mxu0 0.0
  %1362 = vmatpush1.msra.mxu0 0.0
  %1363 = vmatprep.subr.mxu0 0.0
  %1364 = vmatpush1.msra.mxu0 0.0
  %1365 = vmatprep.mubr.f32.mxu0 0.0
  %1366 = vmatmul.mubr.f32.gmra.mrb[0].mxu0 %v1159
  %v1367 = vpop.f32.mrb[0].mxu0
  %v1368 = vadd.f32 %v598, %v1367
  %v1369 = vpop.f32.mrb[0].mxu0
  %1370 = vdwg.mxu0
  %v1371 = vadd.f32 %v207, %v1228
  %v1372 = vtanh.pop %v1371
  %v1373 = vmul.f32 %v1372, 0.5
  %v1374 = vadd.f32 %v1373, 0.5
  %v1375 = vadd.f32 %v316, %v1298
  %v1376 = vtanh.pop %v1375
  %v1377 = vmul.f32 %v1376, 0.5
  %v1378 = vadd.f32 %v1377, 0.5
  %v1379 = vmul.f32 %v1374, %v1368
  %v1380 = vadd.f32 %v425, %v1379
  %v1381 = vtanh.pop %v1380
  %v1382 = vsub.f32 %v1150, %v1381
  %v1383 = vmul.f32 %v1378, %v1382
  %v1384 = vadd.f32 %v1381, %v1383
  %vm1385 = vcmp.gt.s32.totalorder %v450, 3
  %v1386 = vsel %vm1385, %v1384, %v1150
  %v1387 = vsel %vm1385, %v1384, 0.0
  %1389 = vrot.lane.b32.xlu0 %v1387, 96
  %v1390 = vpop.permute.xlu0 %1389
  %vm1392 = vcmask 1048320
  %1393 = vst.msk [vmem:[%s2] sm:$0xff] %vm1392, %v1390
  %v1395 = vsel %vm451, %v1386, 0
  %1397 = vmatprep.subr.mxu0 0.0
  %1398 = vmatpush1.msra.mxu0 %v73
  %1399 = vmatprep.subr.mxu0 0.0
  %1400 = vmatpush1.msra.mxu0 %v74
  %1401 = vmatprep.subr.mxu0 0.0
  %1402 = vmatpush1.msra.mxu0 %v75
  %1403 = vmatprep.subr.mxu0 0.0
  %1404 = vmatpush1.msra.mxu0 %v76
  %1405 = vmatprep.subr.mxu0 0.0
  %1406 = vmatpush1.msra.mxu0 0.0
  %1407 = vmatprep.subr.mxu0 0.0
  %1408 = vmatpush1.msra.mxu0 0.0
  %1409 = vmatprep.subr.mxu0 0.0
  %1410 = vmatpush1.msra.mxu0 0.0
  %1411 = vmatprep.subr.mxu0 0.0
  %1412 = vmatpush1.msra.mxu0 0.0
  %1413 = vmatprep.subr.mxu0 0.0
  %1414 = vmatpush1.msra.mxu0 0.0
  %1415 = vmatprep.subr.mxu0 0.0
  %1416 = vmatpush1.msra.mxu0 0.0
  %1417 = vmatprep.subr.mxu0 0.0
  %1418 = vmatpush1.msra.mxu0 0.0
  %1419 = vmatprep.subr.mxu0 0.0
  %1420 = vmatpush1.msra.mxu0 0.0
  %1421 = vmatprep.subr.mxu0 0.0
  %1422 = vmatpush1.msra.mxu0 0.0
  %1423 = vmatprep.subr.mxu0 0.0
  %1424 = vmatpush1.msra.mxu0 0.0
  %1425 = vmatprep.subr.mxu0 0.0
  %1426 = vmatpush1.msra.mxu0 0.0
  %1427 = vmatprep.subr.mxu0 0.0
  %1428 = vmatpush1.msra.mxu0 0.0
  %1429 = vmatprep.subr.mxu0 0.0
  %1430 = vmatpush1.msra.mxu0 0.0
  %1431 = vmatprep.subr.mxu0 0.0
  %1432 = vmatpush1.msra.mxu0 0.0
  %1433 = vmatprep.subr.mxu0 0.0
  %1434 = vmatpush1.msra.mxu0 0.0
  %1435 = vmatprep.subr.mxu0 0.0
  %1436 = vmatpush1.msra.mxu0 0.0
  %1437 = vmatprep.subr.mxu0 0.0
  %1438 = vmatpush1.msra.mxu0 0.0
  %1439 = vmatprep.subr.mxu0 0.0
  %1440 = vmatpush1.msra.mxu0 0.0
  %1441 = vmatprep.subr.mxu0 0.0
  %1442 = vmatpush1.msra.mxu0 0.0
  %1443 = vmatprep.subr.mxu0 0.0
  %1444 = vmatpush1.msra.mxu0 0.0
  %1445 = vmatprep.subr.mxu0 0.0
  %1446 = vmatpush1.msra.mxu0 0.0
  %1447 = vmatprep.subr.mxu0 0.0
  %1448 = vmatpush1.msra.mxu0 0.0
  %1449 = vmatprep.subr.mxu0 0.0
  %1450 = vmatpush1.msra.mxu0 0.0
  %1451 = vmatprep.subr.mxu0 0.0
  %1452 = vmatpush1.msra.mxu0 0.0
  %1453 = vmatprep.subr.mxu0 0.0
  %1454 = vmatpush1.msra.mxu0 0.0
  %1455 = vmatprep.subr.mxu0 0.0
  %1456 = vmatpush1.msra.mxu0 0.0
  %1457 = vmatprep.subr.mxu0 0.0
  %1458 = vmatpush1.msra.mxu0 0.0
  %1459 = vmatprep.subr.mxu0 0.0
  %1460 = vmatpush1.msra.mxu0 0.0
  %1461 = vmatprep.mubr.f32.mxu0 0.0
  %1462 = vmatmul.mubr.f32.gmra.mrb[0].mxu0 %v1395
  %v1463 = vpop.f32.mrb[0].mxu0
  %v1464 = vadd.f32 0.0, %v1463
  %v1465 = vpop.f32.mrb[0].mxu0
  %1466 = vdwg.mxu0
  %1467 = vmatprep.subr.mxu0 0.0
  %1468 = vmatpush1.msra.mxu0 %v82
  %1469 = vmatprep.subr.mxu0 0.0
  %1470 = vmatpush1.msra.mxu0 %v83
  %1471 = vmatprep.subr.mxu0 0.0
  %1472 = vmatpush1.msra.mxu0 %v84
  %1473 = vmatprep.subr.mxu0 0.0
  %1474 = vmatpush1.msra.mxu0 %v85
  %1475 = vmatprep.subr.mxu0 0.0
  %1476 = vmatpush1.msra.mxu0 0.0
  %1477 = vmatprep.subr.mxu0 0.0
  %1478 = vmatpush1.msra.mxu0 0.0
  %1479 = vmatprep.subr.mxu0 0.0
  %1480 = vmatpush1.msra.mxu0 0.0
  %1481 = vmatprep.subr.mxu0 0.0
  %1482 = vmatpush1.msra.mxu0 0.0
  %1483 = vmatprep.subr.mxu0 0.0
  %1484 = vmatpush1.msra.mxu0 0.0
  %1485 = vmatprep.subr.mxu0 0.0
  %1486 = vmatpush1.msra.mxu0 0.0
  %1487 = vmatprep.subr.mxu0 0.0
  %1488 = vmatpush1.msra.mxu0 0.0
  %1489 = vmatprep.subr.mxu0 0.0
  %1490 = vmatpush1.msra.mxu0 0.0
  %1491 = vmatprep.subr.mxu0 0.0
  %1492 = vmatpush1.msra.mxu0 0.0
  %1493 = vmatprep.subr.mxu0 0.0
  %1494 = vmatpush1.msra.mxu0 0.0
  %1495 = vmatprep.subr.mxu0 0.0
  %1496 = vmatpush1.msra.mxu0 0.0
  %1497 = vmatprep.subr.mxu0 0.0
  %1498 = vmatpush1.msra.mxu0 0.0
  %1499 = vmatprep.subr.mxu0 0.0
  %1500 = vmatpush1.msra.mxu0 0.0
  %1501 = vmatprep.subr.mxu0 0.0
  %1502 = vmatpush1.msra.mxu0 0.0
  %1503 = vmatprep.subr.mxu0 0.0
  %1504 = vmatpush1.msra.mxu0 0.0
  %1505 = vmatprep.subr.mxu0 0.0
  %1506 = vmatpush1.msra.mxu0 0.0
  %1507 = vmatprep.subr.mxu0 0.0
  %1508 = vmatpush1.msra.mxu0 0.0
  %1509 = vmatprep.subr.mxu0 0.0
  %1510 = vmatpush1.msra.mxu0 0.0
  %1511 = vmatprep.subr.mxu0 0.0
  %1512 = vmatpush1.msra.mxu0 0.0
  %1513 = vmatprep.subr.mxu0 0.0
  %1514 = vmatpush1.msra.mxu0 0.0
  %1515 = vmatprep.subr.mxu0 0.0
  %1516 = vmatpush1.msra.mxu0 0.0
  %1517 = vmatprep.subr.mxu0 0.0
  %1518 = vmatpush1.msra.mxu0 0.0
  %1519 = vmatprep.subr.mxu0 0.0
  %1520 = vmatpush1.msra.mxu0 0.0
  %1521 = vmatprep.subr.mxu0 0.0
  %1522 = vmatpush1.msra.mxu0 0.0
  %1523 = vmatprep.subr.mxu0 0.0
  %1524 = vmatpush1.msra.mxu0 0.0
  %1525 = vmatprep.subr.mxu0 0.0
  %1526 = vmatpush1.msra.mxu0 0.0
  %1527 = vmatprep.subr.mxu0 0.0
  %1528 = vmatpush1.msra.mxu0 0.0
  %1529 = vmatprep.subr.mxu0 0.0
  %1530 = vmatpush1.msra.mxu0 0.0
  %1531 = vmatprep.mubr.f32.mxu0 0.0
  %1532 = vmatmul.mubr.f32.gmra.mrb[0].mxu0 %v1395
  %v1533 = vpop.f32.mrb[0].mxu0
  %v1534 = vadd.f32 0.0, %v1533
  %v1535 = vpop.f32.mrb[0].mxu0
  %1536 = vdwg.mxu0
  %1537 = vmatprep.subr.mxu0 0.0
  %1538 = vmatpush1.msra.mxu0 %v91
  %1539 = vmatprep.subr.mxu0 0.0
  %1540 = vmatpush1.msra.mxu0 %v92
  %1541 = vmatprep.subr.mxu0 0.0
  %1542 = vmatpush1.msra.mxu0 %v93
  %1543 = vmatprep.subr.mxu0 0.0
  %1544 = vmatpush1.msra.mxu0 %v94
  %1545 = vmatprep.subr.mxu0 0.0
  %1546 = vmatpush1.msra.mxu0 0.0
  %1547 = vmatprep.subr.mxu0 0.0
  %1548 = vmatpush1.msra.mxu0 0.0
  %1549 = vmatprep.subr.mxu0 0.0
  %1550 = vmatpush1.msra.mxu0 0.0
  %1551 = vmatprep.subr.mxu0 0.0
  %1552 = vmatpush1.msra.mxu0 0.0
  %1553 = vmatprep.subr.mxu0 0.0
  %1554 = vmatpush1.msra.mxu0 0.0
  %1555 = vmatprep.subr.mxu0 0.0
  %1556 = vmatpush1.msra.mxu0 0.0
  %1557 = vmatprep.subr.mxu0 0.0
  %1558 = vmatpush1.msra.mxu0 0.0
  %1559 = vmatprep.subr.mxu0 0.0
  %1560 = vmatpush1.msra.mxu0 0.0
  %1561 = vmatprep.subr.mxu0 0.0
  %1562 = vmatpush1.msra.mxu0 0.0
  %1563 = vmatprep.subr.mxu0 0.0
  %1564 = vmatpush1.msra.mxu0 0.0
  %1565 = vmatprep.subr.mxu0 0.0
  %1566 = vmatpush1.msra.mxu0 0.0
  %1567 = vmatprep.subr.mxu0 0.0
  %1568 = vmatpush1.msra.mxu0 0.0
  %1569 = vmatprep.subr.mxu0 0.0
  %1570 = vmatpush1.msra.mxu0 0.0
  %1571 = vmatprep.subr.mxu0 0.0
  %1572 = vmatpush1.msra.mxu0 0.0
  %1573 = vmatprep.subr.mxu0 0.0
  %1574 = vmatpush1.msra.mxu0 0.0
  %1575 = vmatprep.subr.mxu0 0.0
  %1576 = vmatpush1.msra.mxu0 0.0
  %1577 = vmatprep.subr.mxu0 0.0
  %1578 = vmatpush1.msra.mxu0 0.0
  %1579 = vmatprep.subr.mxu0 0.0
  %1580 = vmatpush1.msra.mxu0 0.0
  %1581 = vmatprep.subr.mxu0 0.0
  %1582 = vmatpush1.msra.mxu0 0.0
  %1583 = vmatprep.subr.mxu0 0.0
  %1584 = vmatpush1.msra.mxu0 0.0
  %1585 = vmatprep.subr.mxu0 0.0
  %1586 = vmatpush1.msra.mxu0 0.0
  %1587 = vmatprep.subr.mxu0 0.0
  %1588 = vmatpush1.msra.mxu0 0.0
  %1589 = vmatprep.subr.mxu0 0.0
  %1590 = vmatpush1.msra.mxu0 0.0
  %1591 = vmatprep.subr.mxu0 0.0
  %1592 = vmatpush1.msra.mxu0 0.0
  %1593 = vmatprep.subr.mxu0 0.0
  %1594 = vmatpush1.msra.mxu0 0.0
  %1595 = vmatprep.subr.mxu0 0.0
  %1596 = vmatpush1.msra.mxu0 0.0
  %1597 = vmatprep.subr.mxu0 0.0
  %1598 = vmatpush1.msra.mxu0 0.0
  %1599 = vmatprep.subr.mxu0 0.0
  %1600 = vmatpush1.msra.mxu0 0.0
  %1601 = vmatprep.mubr.f32.mxu0 0.0
  %1602 = vmatmul.mubr.f32.gmra.mrb[0].mxu0 %v1395
  %v1603 = vpop.f32.mrb[0].mxu0
  %v1604 = vadd.f32 %v598, %v1603
  %v1605 = vpop.f32.mrb[0].mxu0
  %1606 = vdwg.mxu0
  %v1607 = vadd.f32 %v212, %v1464
  %v1608 = vtanh.pop %v1607
  %v1609 = vmul.f32 %v1608, 0.5
  %v1610 = vadd.f32 %v1609, 0.5
  %v1611 = vadd.f32 %v321, %v1534
  %v1612 = vtanh.pop %v1611
  %v1613 = vmul.f32 %v1612, 0.5
  %v1614 = vadd.f32 %v1613, 0.5
  %v1615 = vmul.f32 %v1610, %v1604
  %v1616 = vadd.f32 %v430, %v1615
  %v1617 = vtanh.pop %v1616
  %v1618 = vsub.f32 %v1386, %v1617
  %v1619 = vmul.f32 %v1614, %v1618
  %v1620 = vadd.f32 %v1617, %v1619
  %vm1621 = vcmp.gt.s32.totalorder %v450, 4
  %v1622 = vsel %vm1621, %v1620, %v1386
  %v1623 = vsel %vm1621, %v1620, 0.0
  %1624 = vst.msk [vmem:[%s2 + $0x8] sm:$0xff] %vm451, %v1623
  %v1626 = vsel %vm451, %v1622, 0
  %1628 = vmatprep.subr.mxu0 0.0
  %1629 = vmatpush1.msra.mxu0 %v73
  %1630 = vmatprep.subr.mxu0 0.0
  %1631 = vmatpush1.msra.mxu0 %v74
  %1632 = vmatprep.subr.mxu0 0.0
  %1633 = vmatpush1.msra.mxu0 %v75
  %1634 = vmatprep.subr.mxu0 0.0
  %1635 = vmatpush1.msra.mxu0 %v76
  %1636 = vmatprep.subr.mxu0 0.0
  %1637 = vmatpush1.msra.mxu0 0.0
  %1638 = vmatprep.subr.mxu0 0.0
  %1639 = vmatpush1.msra.mxu0 0.0
  %1640 = vmatprep.subr.mxu0 0.0
  %1641 = vmatpush1.msra.mxu0 0.0
  %1642 = vmatprep.subr.mxu0 0.0
  %1643 = vmatpush1.msra.mxu0 0.0
  %1644 = vmatprep.subr.mxu0 0.0
  %1645 = vmatpush1.msra.mxu0 0.0
  %1646 = vmatprep.subr.mxu0 0.0
  %1647 = vmatpush1.msra.mxu0 0.0
  %1648 = vmatprep.subr.mxu0 0.0
  %1649 = vmatpush1.msra.mxu0 0.0
  %1650 = vmatprep.subr.mxu0 0.0
  %1651 = vmatpush1.msra.mxu0 0.0
  %1652 = vmatprep.subr.mxu0 0.0
  %1653 = vmatpush1.msra.mxu0 0.0
  %1654 = vmatprep.subr.mxu0 0.0
  %1655 = vmatpush1.msra.mxu0 0.0
  %1656 = vmatprep.subr.mxu0 0.0
  %1657 = vmatpush1.msra.mxu0 0.0
  %1658 = vmatprep.subr.mxu0 0.0
  %1659 = vmatpush1.msra.mxu0 0.0
  %1660 = vmatprep.subr.mxu0 0.0
  %1661 = vmatpush1.msra.mxu0 0.0
  %1662 = vmatprep.subr.mxu0 0.0
  %1663 = vmatpush1.msra.mxu0 0.0
  %1664 = vmatprep.subr.mxu0 0.0
  %1665 = vmatpush1.msra.mxu0 0.0
  %1666 = vmatprep.subr.mxu0 0.0
  %1667 = vmatpush1.msra.mxu0 0.0
  %1668 = vmatprep.subr.mxu0 0.0
  %1669 = vmatpush1.msra.mxu0 0.0
  %1670 = vmatprep.subr.mxu0 0.0
  %1671 = vmatpush1.msra.mxu0 0.0
  %1672 = vmatprep.subr.mxu0 0.0
  %1673 = vmatpush1.msra.mxu0 0.0
  %1674 = vmatprep.subr.mxu0 0.0
  %1675 = vmatpush1.msra.mxu0 0.0
  %1676 = vmatprep.subr.mxu0 0.0
  %1677 = vmatpush1.msra.mxu0 0.0
  %1678 = vmatprep.subr.mxu0 0.0
  %1679 = vmatpush1.msra.mxu0 0.0
  %1680 = vmatprep.subr.mxu0 0.0
  %1681 = vmatpush1.msra.mxu0 0.0
  %1682 = vmatprep.subr.mxu0 0.0
  %1683 = vmatpush1.msra.mxu0 0.0
  %1684 = vmatprep.subr.mxu0 0.0
  %1685 = vmatpush1.msra.mxu0 0.0
  %1686 = vmatprep.subr.mxu0 0.0
  %1687 = vmatpush1.msra.mxu0 0.0
  %1688 = vmatprep.subr.mxu0 0.0
  %1689 = vmatpush1.msra.mxu0 0.0
  %1690 = vmatprep.subr.mxu0 0.0
  %1691 = vmatpush1.msra.mxu0 0.0
  %1692 = vmatprep.mubr.f32.mxu0 0.0
  %1693 = vmatmul.mubr.f32.gmra.mrb[0].mxu0 %v1626
  %v1694 = vpop.f32.mrb[0].mxu0
  %v1695 = vadd.f32 0.0, %v1694
  %v1696 = vpop.f32.mrb[0].mxu0
  %1697 = vdwg.mxu0
  %1698 = vmatprep.subr.mxu0 0.0
  %1699 = vmatpush1.msra.mxu0 %v82
  %1700 = vmatprep.subr.mxu0 0.0
  %1701 = vmatpush1.msra.mxu0 %v83
  %1702 = vmatprep.subr.mxu0 0.0
  %1703 = vmatpush1.msra.mxu0 %v84
  %1704 = vmatprep.subr.mxu0 0.0
  %1705 = vmatpush1.msra.mxu0 %v85
  %1706 = vmatprep.subr.mxu0 0.0
  %1707 = vmatpush1.msra.mxu0 0.0
  %1708 = vmatprep.subr.mxu0 0.0
  %1709 = vmatpush1.msra.mxu0 0.0
  %1710 = vmatprep.subr.mxu0 0.0
  %1711 = vmatpush1.msra.mxu0 0.0
  %1712 = vmatprep.subr.mxu0 0.0
  %1713 = vmatpush1.msra.mxu0 0.0
  %1714 = vmatprep.subr.mxu0 0.0
  %1715 = vmatpush1.msra.mxu0 0.0
  %1716 = vmatprep.subr.mxu0 0.0
  %1717 = vmatpush1.msra.mxu0 0.0
  %1718 = vmatprep.subr.mxu0 0.0
  %1719 = vmatpush1.msra.mxu0 0.0
  %1720 = vmatprep.subr.mxu0 0.0
  %1721 = vmatpush1.msra.mxu0 0.0
  %1722 = vmatprep.subr.mxu0 0.0
  %1723 = vmatpush1.msra.mxu0 0.0
  %1724 = vmatprep.subr.mxu0 0.0
  %1725 = vmatpush1.msra.mxu0 0.0
  %1726 = vmatprep.subr.mxu0 0.0
  %1727 = vmatpush1.msra.mxu0 0.0
  %1728 = vmatprep.subr.mxu0 0.0
  %1729 = vmatpush1.msra.mxu0 0.0
  %1730 = vmatprep.subr.mxu0 0.0
  %1731 = vmatpush1.msra.mxu0 0.0
  %1732 = vmatprep.subr.mxu0 0.0
  %1733 = vmatpush1.msra.mxu0 0.0
  %1734 = vmatprep.subr.mxu0 0.0
  %1735 = vmatpush1.msra.mxu0 0.0
  %1736 = vmatprep.subr.mxu0 0.0
  %1737 = vmatpush1.msra.mxu0 0.0
  %1738 = vmatprep.subr.mxu0 0.0
  %1739 = vmatpush1.msra.mxu0 0.0
  %1740 = vmatprep.subr.mxu0 0.0
  %1741 = vmatpush1.msra.mxu0 0.0
  %1742 = vmatprep.subr.mxu0 0.0
  %1743 = vmatpush1.msra.mxu0 0.0
  %1744 = vmatprep.subr.mxu0 0.0
  %1745 = vmatpush1.msra.mxu0 0.0
  %1746 = vmatprep.subr.mxu0 0.0
  %1747 = vmatpush1.msra.mxu0 0.0
  %1748 = vmatprep.subr.mxu0 0.0
  %1749 = vmatpush1.msra.mxu0 0.0
  %1750 = vmatprep.subr.mxu0 0.0
  %1751 = vmatpush1.msra.mxu0 0.0
  %1752 = vmatprep.subr.mxu0 0.0
  %1753 = vmatpush1.msra.mxu0 0.0
  %1754 = vmatprep.subr.mxu0 0.0
  %1755 = vmatpush1.msra.mxu0 0.0
  %1756 = vmatprep.subr.mxu0 0.0
  %1757 = vmatpush1.msra.mxu0 0.0
  %1758 = vmatprep.subr.mxu0 0.0
  %1759 = vmatpush1.msra.mxu0 0.0
  %1760 = vmatprep.subr.mxu0 0.0
  %1761 = vmatpush1.msra.mxu0 0.0
  %1762 = vmatprep.mubr.f32.mxu0 0.0
  %1763 = vmatmul.mubr.f32.gmra.mrb[0].mxu0 %v1626
  %v1764 = vpop.f32.mrb[0].mxu0
  %v1765 = vadd.f32 0.0, %v1764
  %v1766 = vpop.f32.mrb[0].mxu0
  %1767 = vdwg.mxu0
  %1768 = vmatprep.subr.mxu0 0.0
  %1769 = vmatpush1.msra.mxu0 %v91
  %1770 = vmatprep.subr.mxu0 0.0
  %1771 = vmatpush1.msra.mxu0 %v92
  %1772 = vmatprep.subr.mxu0 0.0
  %1773 = vmatpush1.msra.mxu0 %v93
  %1774 = vmatprep.subr.mxu0 0.0
  %1775 = vmatpush1.msra.mxu0 %v94
  %1776 = vmatprep.subr.mxu0 0.0
  %1777 = vmatpush1.msra.mxu0 0.0
  %1778 = vmatprep.subr.mxu0 0.0
  %1779 = vmatpush1.msra.mxu0 0.0
  %1780 = vmatprep.subr.mxu0 0.0
  %1781 = vmatpush1.msra.mxu0 0.0
  %1782 = vmatprep.subr.mxu0 0.0
  %1783 = vmatpush1.msra.mxu0 0.0
  %1784 = vmatprep.subr.mxu0 0.0
  %1785 = vmatpush1.msra.mxu0 0.0
  %1786 = vmatprep.subr.mxu0 0.0
  %1787 = vmatpush1.msra.mxu0 0.0
  %1788 = vmatprep.subr.mxu0 0.0
  %1789 = vmatpush1.msra.mxu0 0.0
  %1790 = vmatprep.subr.mxu0 0.0
  %1791 = vmatpush1.msra.mxu0 0.0
  %1792 = vmatprep.subr.mxu0 0.0
  %1793 = vmatpush1.msra.mxu0 0.0
  %1794 = vmatprep.subr.mxu0 0.0
  %1795 = vmatpush1.msra.mxu0 0.0
  %1796 = vmatprep.subr.mxu0 0.0
  %1797 = vmatpush1.msra.mxu0 0.0
  %1798 = vmatprep.subr.mxu0 0.0
  %1799 = vmatpush1.msra.mxu0 0.0
  %1800 = vmatprep.subr.mxu0 0.0
  %1801 = vmatpush1.msra.mxu0 0.0
  %1802 = vmatprep.subr.mxu0 0.0
  %1803 = vmatpush1.msra.mxu0 0.0
  %1804 = vmatprep.subr.mxu0 0.0
  %1805 = vmatpush1.msra.mxu0 0.0
  %1806 = vmatprep.subr.mxu0 0.0
  %1807 = vmatpush1.msra.mxu0 0.0
  %1808 = vmatprep.subr.mxu0 0.0
  %1809 = vmatpush1.msra.mxu0 0.0
  %1810 = vmatprep.subr.mxu0 0.0
  %1811 = vmatpush1.msra.mxu0 0.0
  %1812 = vmatprep.subr.mxu0 0.0
  %1813 = vmatpush1.msra.mxu0 0.0
  %1814 = vmatprep.subr.mxu0 0.0
  %1815 = vmatpush1.msra.mxu0 0.0
  %1816 = vmatprep.subr.mxu0 0.0
  %1817 = vmatpush1.msra.mxu0 0.0
  %1818 = vmatprep.subr.mxu0 0.0
  %1819 = vmatpush1.msra.mxu0 0.0
  %1820 = vmatprep.subr.mxu0 0.0
  %1821 = vmatpush1.msra.mxu0 0.0
  %1822 = vmatprep.subr.mxu0 0.0
  %1823 = vmatpush1.msra.mxu0 0.0
  %1824 = vmatprep.subr.mxu0 0.0
  %1825 = vmatpush1.msra.mxu0 0.0
  %1826 = vmatprep.subr.mxu0 0.0
  %1827 = vmatpush1.msra.mxu0 0.0
  %1828 = vmatprep.subr.mxu0 0.0
  %1829 = vmatpush1.msra.mxu0 0.0
  %1830 = vmatprep.subr.mxu0 0.0
  %1831 = vmatpush1.msra.mxu0 0.0
  %1832 = vmatprep.mubr.f32.mxu0 0.0
  %1833 = vmatmul.mubr.f32.gmra.mrb[0].mxu0 %v1626
  %v1834 = vpop.f32.mrb[0].mxu0
  %v1835 = vadd.f32 %v598, %v1834
  %v1836 = vpop.f32.mrb[0].mxu0
  %1837 = vdwg.mxu0
  %v1838 = vadd.f32 %v217, %v1695
  %v1839 = vtanh.pop %v1838
  %v1840 = vmul.f32 %v1839, 0.5
  %v1841 = vadd.f32 %v1840, 0.5
  %v1842 = vadd.f32 %v326, %v1765
  %v1843 = vtanh.pop %v1842
  %v1844 = vmul.f32 %v1843, 0.5
  %v1845 = vadd.f32 %v1844, 0.5
  %v1846 = vmul.f32 %v1841, %v1835
  %v1847 = vadd.f32 %v435, %v1846
  %v1848 = vtanh.pop %v1847
  %v1849 = vsub.f32 %v1622, %v1848
  %v1850 = vmul.f32 %v1845, %v1849
  %v1851 = vadd.f32 %v1848, %v1850
  %vm1852 = vcmp.gt.s32.totalorder %v450, 5
  %v1853 = vsel %vm1852, %v1851, %v1622
  %v1854 = vsel %vm1852, %v1851, 0.0
  %1856 = vrot.lane.b32.xlu0 %v1854, 32
  %v1857 = vpop.permute.xlu0 %1856
  %1859 = vst.msk [vmem:[%s2 + $0x8] sm:$0xff] %vm920, %v1857
  %v1861 = vsel %vm451, %v1853, 0
  %1863 = vmatprep.subr.mxu0 0.0
  %1864 = vmatpush1.msra.mxu0 %v73
  %1865 = vmatprep.subr.mxu0 0.0
  %1866 = vmatpush1.msra.mxu0 %v74
  %1867 = vmatprep.subr.mxu0 0.0
  %1868 = vmatpush1.msra.mxu0 %v75
  %1869 = vmatprep.subr.mxu0 0.0
  %1870 = vmatpush1.msra.mxu0 %v76
  %1871 = vmatprep.subr.mxu0 0.0
  %1872 = vmatpush1.msra.mxu0 0.0
  %1873 = vmatprep.subr.mxu0 0.0
  %1874 = vmatpush1.msra.mxu0 0.0
  %1875 = vmatprep.subr.mxu0 0.0
  %1876 = vmatpush1.msra.mxu0 0.0
  %1877 = vmatprep.subr.mxu0 0.0
  %1878 = vmatpush1.msra.mxu0 0.0
  %1879 = vmatprep.subr.mxu0 0.0
  %1880 = vmatpush1.msra.mxu0 0.0
  %1881 = vmatprep.subr.mxu0 0.0
  %1882 = vmatpush1.msra.mxu0 0.0
  %1883 = vmatprep.subr.mxu0 0.0
  %1884 = vmatpush1.msra.mxu0 0.0
  %1885 = vmatprep.subr.mxu0 0.0
  %1886 = vmatpush1.msra.mxu0 0.0
  %1887 = vmatprep.subr.mxu0 0.0
  %1888 = vmatpush1.msra.mxu0 0.0
  %1889 = vmatprep.subr.mxu0 0.0
  %1890 = vmatpush1.msra.mxu0 0.0
  %1891 = vmatprep.subr.mxu0 0.0
  %1892 = vmatpush1.msra.mxu0 0.0
  %1893 = vmatprep.subr.mxu0 0.0
  %1894 = vmatpush1.msra.mxu0 0.0
  %1895 = vmatprep.subr.mxu0 0.0
  %1896 = vmatpush1.msra.mxu0 0.0
  %1897 = vmatprep.subr.mxu0 0.0
  %1898 = vmatpush1.msra.mxu0 0.0
  %1899 = vmatprep.subr.mxu0 0.0
  %1900 = vmatpush1.msra.mxu0 0.0
  %1901 = vmatprep.subr.mxu0 0.0
  %1902 = vmatpush1.msra.mxu0 0.0
  %1903 = vmatprep.subr.mxu0 0.0
  %1904 = vmatpush1.msra.mxu0 0.0
  %1905 = vmatprep.subr.mxu0 0.0
  %1906 = vmatpush1.msra.mxu0 0.0
  %1907 = vmatprep.subr.mxu0 0.0
  %1908 = vmatpush1.msra.mxu0 0.0
  %1909 = vmatprep.subr.mxu0 0.0
  %1910 = vmatpush1.msra.mxu0 0.0
  %1911 = vmatprep.subr.mxu0 0.0
  %1912 = vmatpush1.msra.mxu0 0.0
  %1913 = vmatprep.subr.mxu0 0.0
  %1914 = vmatpush1.msra.mxu0 0.0
  %1915 = vmatprep.subr.mxu0 0.0
  %1916 = vmatpush1.msra.mxu0 0.0
  %1917 = vmatprep.subr.mxu0 0.0
  %1918 = vmatpush1.msra.mxu0 0.0
  %1919 = vmatprep.subr.mxu0 0.0
  %1920 = vmatpush1.msra.mxu0 0.0
  %1921 = vmatprep.subr.mxu0 0.0
  %1922 = vmatpush1.msra.mxu0 0.0
  %1923 = vmatprep.subr.mxu0 0.0
  %1924 = vmatpush1.msra.mxu0 0.0
  %1925 = vmatprep.subr.mxu0 0.0
  %1926 = vmatpush1.msra.mxu0 0.0
  %1927 = vmatprep.mubr.f32.mxu0 0.0
  %1928 = vmatmul.mubr.f32.gmra.mrb[0].mxu0 %v1861
  %v1929 = vpop.f32.mrb[0].mxu0
  %v1930 = vadd.f32 0.0, %v1929
  %v1931 = vpop.f32.mrb[0].mxu0
  %1932 = vdwg.mxu0
  %1933 = vmatprep.subr.mxu0 0.0
  %1934 = vmatpush1.msra.mxu0 %v82
  %1935 = vmatprep.subr.mxu0 0.0
  %1936 = vmatpush1.msra.mxu0 %v83
  %1937 = vmatprep.subr.mxu0 0.0
  %1938 = vmatpush1.msra.mxu0 %v84
  %1939 = vmatprep.subr.mxu0 0.0
  %1940 = vmatpush1.msra.mxu0 %v85
  %1941 = vmatprep.subr.mxu0 0.0
  %1942 = vmatpush1.msra.mxu0 0.0
  %1943 = vmatprep.subr.mxu0 0.0
  %1944 = vmatpush1.msra.mxu0 0.0
  %1945 = vmatprep.subr.mxu0 0.0
  %1946 = vmatpush1.msra.mxu0 0.0
  %1947 = vmatprep.subr.mxu0 0.0
  %1948 = vmatpush1.msra.mxu0 0.0
  %1949 = vmatprep.subr.mxu0 0.0
  %1950 = vmatpush1.msra.mxu0 0.0
  %1951 = vmatprep.subr.mxu0 0.0
  %1952 = vmatpush1.msra.mxu0 0.0
  %1953 = vmatprep.subr.mxu0 0.0
  %1954 = vmatpush1.msra.mxu0 0.0
  %1955 = vmatprep.subr.mxu0 0.0
  %1956 = vmatpush1.msra.mxu0 0.0
  %1957 = vmatprep.subr.mxu0 0.0
  %1958 = vmatpush1.msra.mxu0 0.0
  %1959 = vmatprep.subr.mxu0 0.0
  %1960 = vmatpush1.msra.mxu0 0.0
  %1961 = vmatprep.subr.mxu0 0.0
  %1962 = vmatpush1.msra.mxu0 0.0
  %1963 = vmatprep.subr.mxu0 0.0
  %1964 = vmatpush1.msra.mxu0 0.0
  %1965 = vmatprep.subr.mxu0 0.0
  %1966 = vmatpush1.msra.mxu0 0.0
  %1967 = vmatprep.subr.mxu0 0.0
  %1968 = vmatpush1.msra.mxu0 0.0
  %1969 = vmatprep.subr.mxu0 0.0
  %1970 = vmatpush1.msra.mxu0 0.0
  %1971 = vmatprep.subr.mxu0 0.0
  %1972 = vmatpush1.msra.mxu0 0.0
  %1973 = vmatprep.subr.mxu0 0.0
  %1974 = vmatpush1.msra.mxu0 0.0
  %1975 = vmatprep.subr.mxu0 0.0
  %1976 = vmatpush1.msra.mxu0 0.0
  %1977 = vmatprep.subr.mxu0 0.0
  %1978 = vmatpush1.msra.mxu0 0.0
  %1979 = vmatprep.subr.mxu0 0.0
  %1980 = vmatpush1.msra.mxu0 0.0
  %1981 = vmatprep.subr.mxu0 0.0
  %1982 = vmatpush1.msra.mxu0 0.0
  %1983 = vmatprep.subr.mxu0 0.0
  %1984 = vmatpush1.msra.mxu0 0.0
  %1985 = vmatprep.subr.mxu0 0.0
  %1986 = vmatpush1.msra.mxu0 0.0
  %1987 = vmatprep.subr.mxu0 0.0
  %1988 = vmatpush1.msra.mxu0 0.0
  %1989 = vmatprep.subr.mxu0 0.0
  %1990 = vmatpush1.msra.mxu0 0.0
  %1991 = vmatprep.subr.mxu0 0.0
  %1992 = vmatpush1.msra.mxu0 0.0
  %1993 = vmatprep.subr.mxu0 0.0
  %1994 = vmatpush1.msra.mxu0 0.0
  %1995 = vmatprep.subr.mxu0 0.0
  %1996 = vmatpush1.msra.mxu0 0.0
  %1997 = vmatprep.mubr.f32.mxu0 0.0
  %1998 = vmatmul.mubr.f32.gmra.mrb[0].mxu0 %v1861
  %v1999 = vpop.f32.mrb[0].mxu0
  %v2000 = vadd.f32 0.0, %v1999
  %v2001 = vpop.f32.mrb[0].mxu0
  %2002 = vdwg.mxu0
  %2003 = vmatprep.subr.mxu0 0.0
  %2004 = vmatpush1.msra.mxu0 %v91
  %2005 = vmatprep.subr.mxu0 0.0
  %2006 = vmatpush1.msra.mxu0 %v92
  %2007 = vmatprep.subr.mxu0 0.0
  %2008 = vmatpush1.msra.mxu0 %v93
  %2009 = vmatprep.subr.mxu0 0.0
  %2010 = vmatpush1.msra.mxu0 %v94
  %2011 = vmatprep.subr.mxu0 0.0
  %2012 = vmatpush1.msra.mxu0 0.0
  %2013 = vmatprep.subr.mxu0 0.0
  %2014 = vmatpush1.msra.mxu0 0.0
  %2015 = vmatprep.subr.mxu0 0.0
  %2016 = vmatpush1.msra.mxu0 0.0
  %2017 = vmatprep.subr.mxu0 0.0
  %2018 = vmatpush1.msra.mxu0 0.0
  %2019 = vmatprep.subr.mxu0 0.0
  %2020 = vmatpush1.msra.mxu0 0.0
  %2021 = vmatprep.subr.mxu0 0.0
  %2022 = vmatpush1.msra.mxu0 0.0
  %2023 = vmatprep.subr.mxu0 0.0
  %2024 = vmatpush1.msra.mxu0 0.0
  %2025 = vmatprep.subr.mxu0 0.0
  %2026 = vmatpush1.msra.mxu0 0.0
  %2027 = vmatprep.subr.mxu0 0.0
  %2028 = vmatpush1.msra.mxu0 0.0
  %2029 = vmatprep.subr.mxu0 0.0
  %2030 = vmatpush1.msra.mxu0 0.0
  %2031 = vmatprep.subr.mxu0 0.0
  %2032 = vmatpush1.msra.mxu0 0.0
  %2033 = vmatprep.subr.mxu0 0.0
  %2034 = vmatpush1.msra.mxu0 0.0
  %2035 = vmatprep.subr.mxu0 0.0
  %2036 = vmatpush1.msra.mxu0 0.0
  %2037 = vmatprep.subr.mxu0 0.0
  %2038 = vmatpush1.msra.mxu0 0.0
  %2039 = vmatprep.subr.mxu0 0.0
  %2040 = vmatpush1.msra.mxu0 0.0
  %2041 = vmatprep.subr.mxu0 0.0
  %2042 = vmatpush1.msra.mxu0 0.0
  %2043 = vmatprep.subr.mxu0 0.0
  %2044 = vmatpush1.msra.mxu0 0.0
  %2045 = vmatprep.subr.mxu0 0.0
  %2046 = vmatpush1.msra.mxu0 0.0
  %2047 = vmatprep.subr.mxu0 0.0
  %2048 = vmatpush1.msra.mxu0 0.0
  %2049 = vmatprep.subr.mxu0 0.0
  %2050 = vmatpush1.msra.mxu0 0.0
  %2051 = vmatprep.subr.mxu0 0.0
  %2052 = vmatpush1.msra.mxu0 0.0
  %2053 = vmatprep.subr.mxu0 0.0
  %2054 = vmatpush1.msra.mxu0 0.0
  %2055 = vmatprep.subr.mxu0 0.0
  %2056 = vmatpush1.msra.mxu0 0.0
  %2057 = vmatprep.subr.mxu0 0.0
  %2058 = vmatpush1.msra.mxu0 0.0
  %2059 = vmatprep.subr.mxu0 0.0
  %2060 = vmatpush1.msra.mxu0 0.0
  %2061 = vmatprep.subr.mxu0 0.0
  %2062 = vmatpush1.msra.mxu0 0.0
  %2063 = vmatprep.subr.mxu0 0.0
  %2064 = vmatpush1.msra.mxu0 0.0
  %2065 = vmatprep.subr.mxu0 0.0
  %2066 = vmatpush1.msra.mxu0 0.0
  %2067 = vmatprep.mubr.f32.mxu0 0.0
  %2068 = vmatmul.mubr.f32.gmra.mrb[0].mxu0 %v1861
  %v2069 = vpop.f32.mrb[0].mxu0
  %v2070 = vadd.f32 %v598, %v2069
  %v2071 = vpop.f32.mrb[0].mxu0
  %2072 = vdwg.mxu0
  %v2073 = vadd.f32 %v222, %v1930
  %v2074 = vtanh.pop %v2073
  %v2075 = vmul.f32 %v2074, 0.5
  %v2076 = vadd.f32 %v2075, 0.5
  %v2077 = vadd.f32 %v331, %v2000
  %v2078 = vtanh.pop %v2077
  %v2079 = vmul.f32 %v2078, 0.5
  %v2080 = vadd.f32 %v2079, 0.5
  %v2081 = vmul.f32 %v2076, %v2070
  %v2082 = vadd.f32 %v440, %v2081
  %v2083 = vtanh.pop %v2082
  %v2084 = vsub.f32 %v1853, %v2083
  %v2085 = vmul.f32 %v2080, %v2084
  %v2086 = vadd.f32 %v2083, %v2085
  %vm2087 = vcmp.gt.s32.totalorder %v450, 6
  %v2088 = vsel %vm2087, %v2086, %v1853
  %v2089 = vsel %vm2087, %v2086, 0.0
  %2091 = vrot.lane.b32.xlu0 %v2089, 64
  %v2092 = vpop.permute.xlu0 %2091
  %2094 = vst.msk [vmem:[%s2 + $0x8] sm:$0xff] %vm1156, %v2092
  %v2096 = vsel %vm451, %v2088, 0
  %2098 = vmatprep.subr.mxu0 0.0
  %2099 = vmatpush1.msra.mxu0 %v73
  %2100 = vmatprep.subr.mxu0 0.0
  %2101 = vmatpush1.msra.mxu0 %v74
  %2102 = vmatprep.subr.mxu0 0.0
  %2103 = vmatpush1.msra.mxu0 %v75
  %2104 = vmatprep.subr.mxu0 0.0
  %2105 = vmatpush1.msra.mxu0 %v76
  %2106 = vmatprep.subr.mxu0 0.0
  %2107 = vmatpush1.msra.mxu0 0.0
  %2108 = vmatprep.subr.mxu0 0.0
  %2109 = vmatpush1.msra.mxu0 0.0
  %2110 = vmatprep.subr.mxu0 0.0
  %2111 = vmatpush1.msra.mxu0 0.0
  %2112 = vmatprep.subr.mxu0 0.0
  %2113 = vmatpush1.msra.mxu0 0.0
  %2114 = vmatprep.subr.mxu0 0.0
  %2115 = vmatpush1.msra.mxu0 0.0
  %2116 = vmatprep.subr.mxu0 0.0
  %2117 = vmatpush1.msra.mxu0 0.0
  %2118 = vmatprep.subr.mxu0 0.0
  %2119 = vmatpush1.msra.mxu0 0.0
  %2120 = vmatprep.subr.mxu0 0.0
  %2121 = vmatpush1.msra.mxu0 0.0
  %2122 = vmatprep.subr.mxu0 0.0
  %2123 = vmatpush1.msra.mxu0 0.0
  %2124 = vmatprep.subr.mxu0 0.0
  %2125 = vmatpush1.msra.mxu0 0.0
  %2126 = vmatprep.subr.mxu0 0.0
  %2127 = vmatpush1.msra.mxu0 0.0
  %2128 = vmatprep.subr.mxu0 0.0
  %2129 = vmatpush1.msra.mxu0 0.0
  %2130 = vmatprep.subr.mxu0 0.0
  %2131 = vmatpush1.msra.mxu0 0.0
  %2132 = vmatprep.subr.mxu0 0.0
  %2133 = vmatpush1.msra.mxu0 0.0
  %2134 = vmatprep.subr.mxu0 0.0
  %2135 = vmatpush1.msra.mxu0 0.0
  %2136 = vmatprep.subr.mxu0 0.0
  %2137 = vmatpush1.msra.mxu0 0.0
  %2138 = vmatprep.subr.mxu0 0.0
  %2139 = vmatpush1.msra.mxu0 0.0
  %2140 = vmatprep.subr.mxu0 0.0
  %2141 = vmatpush1.msra.mxu0 0.0
  %2142 = vmatprep.subr.mxu0 0.0
  %2143 = vmatpush1.msra.mxu0 0.0
  %2144 = vmatprep.subr.mxu0 0.0
  %2145 = vmatpush1.msra.mxu0 0.0
  %2146 = vmatprep.subr.mxu0 0.0
  %2147 = vmatpush1.msra.mxu0 0.0
  %2148 = vmatprep.subr.mxu0 0.0
  %2149 = vmatpush1.msra.mxu0 0.0
  %2150 = vmatprep.subr.mxu0 0.0
  %2151 = vmatpush1.msra.mxu0 0.0
  %2152 = vmatprep.subr.mxu0 0.0
  %2153 = vmatpush1.msra.mxu0 0.0
  %2154 = vmatprep.subr.mxu0 0.0
  %2155 = vmatpush1.msra.mxu0 0.0
  %2156 = vmatprep.subr.mxu0 0.0
  %2157 = vmatpush1.msra.mxu0 0.0
  %2158 = vmatprep.subr.mxu0 0.0
  %2159 = vmatpush1.msra.mxu0 0.0
  %2160 = vmatprep.subr.mxu0 0.0
  %2161 = vmatpush1.msra.mxu0 0.0
  %2162 = vmatprep.mubr.f32.mxu0 0.0
  %2163 = vmatmul.mubr.f32.gmra.mrb[0].mxu0 %v2096
  %v2164 = vpop.f32.mrb[0].mxu0
  %v2165 = vadd.f32 0.0, %v2164
  %v2166 = vpop.f32.mrb[0].mxu0
  %2167 = vdwg.mxu0
  %2168 = vmatprep.subr.mxu0 0.0
  %2169 = vmatpush1.msra.mxu0 %v82
  %2170 = vmatprep.subr.mxu0 0.0
  %2171 = vmatpush1.msra.mxu0 %v83
  %2172 = vmatprep.subr.mxu0 0.0
  %2173 = vmatpush1.msra.mxu0 %v84
  %2174 = vmatprep.subr.mxu0 0.0
  %2175 = vmatpush1.msra.mxu0 %v85
  %2176 = vmatprep.subr.mxu0 0.0
  %2177 = vmatpush1.msra.mxu0 0.0
  %2178 = vmatprep.subr.mxu0 0.0
  %2179 = vmatpush1.msra.mxu0 0.0
  %2180 = vmatprep.subr.mxu0 0.0
  %2181 = vmatpush1.msra.mxu0 0.0
  %2182 = vmatprep.subr.mxu0 0.0
  %2183 = vmatpush1.msra.mxu0 0.0
  %2184 = vmatprep.subr.mxu0 0.0
  %2185 = vmatpush1.msra.mxu0 0.0
  %2186 = vmatprep.subr.mxu0 0.0
  %2187 = vmatpush1.msra.mxu0 0.0
  %2188 = vmatprep.subr.mxu0 0.0
  %2189 = vmatpush1.msra.mxu0 0.0
  %2190 = vmatprep.subr.mxu0 0.0
  %2191 = vmatpush1.msra.mxu0 0.0
  %2192 = vmatprep.subr.mxu0 0.0
  %2193 = vmatpush1.msra.mxu0 0.0
  %2194 = vmatprep.subr.mxu0 0.0
  %2195 = vmatpush1.msra.mxu0 0.0
  %2196 = vmatprep.subr.mxu0 0.0
  %2197 = vmatpush1.msra.mxu0 0.0
  %2198 = vmatprep.subr.mxu0 0.0
  %2199 = vmatpush1.msra.mxu0 0.0
  %2200 = vmatprep.subr.mxu0 0.0
  %2201 = vmatpush1.msra.mxu0 0.0
  %2202 = vmatprep.subr.mxu0 0.0
  %2203 = vmatpush1.msra.mxu0 0.0
  %2204 = vmatprep.subr.mxu0 0.0
  %2205 = vmatpush1.msra.mxu0 0.0
  %2206 = vmatprep.subr.mxu0 0.0
  %2207 = vmatpush1.msra.mxu0 0.0
  %2208 = vmatprep.subr.mxu0 0.0
  %2209 = vmatpush1.msra.mxu0 0.0
  %2210 = vmatprep.subr.mxu0 0.0
  %2211 = vmatpush1.msra.mxu0 0.0
  %2212 = vmatprep.subr.mxu0 0.0
  %2213 = vmatpush1.msra.mxu0 0.0
  %2214 = vmatprep.subr.mxu0 0.0
  %2215 = vmatpush1.msra.mxu0 0.0
  %2216 = vmatprep.subr.mxu0 0.0
  %2217 = vmatpush1.msra.mxu0 0.0
  %2218 = vmatprep.subr.mxu0 0.0
  %2219 = vmatpush1.msra.mxu0 0.0
  %2220 = vmatprep.subr.mxu0 0.0
  %2221 = vmatpush1.msra.mxu0 0.0
  %2222 = vmatprep.subr.mxu0 0.0
  %2223 = vmatpush1.msra.mxu0 0.0
  %2224 = vmatprep.subr.mxu0 0.0
  %2225 = vmatpush1.msra.mxu0 0.0
  %2226 = vmatprep.subr.mxu0 0.0
  %2227 = vmatpush1.msra.mxu0 0.0
  %2228 = vmatprep.subr.mxu0 0.0
  %2229 = vmatpush1.msra.mxu0 0.0
  %2230 = vmatprep.subr.mxu0 0.0
  %2231 = vmatpush1.msra.mxu0 0.0
  %2232 = vmatprep.mubr.f32.mxu0 0.0
  %2233 = vmatmul.mubr.f32.gmra.mrb[0].mxu0 %v2096
  %v2234 = vpop.f32.mrb[0].mxu0
  %v2235 = vadd.f32 0.0, %v2234
  %v2236 = vpop.f32.mrb[0].mxu0
  %2237 = vdwg.mxu0
  %2238 = vmatprep.subr.mxu0 0.0
  %2239 = vmatpush1.msra.mxu0 %v91
  %2240 = vmatprep.subr.mxu0 0.0
  %2241 = vmatpush1.msra.mxu0 %v92
  %2242 = vmatprep.subr.mxu0 0.0
  %2243 = vmatpush1.msra.mxu0 %v93
  %2244 = vmatprep.subr.mxu0 0.0
  %2245 = vmatpush1.msra.mxu0 %v94
  %2246 = vmatprep.subr.mxu0 0.0
  %2247 = vmatpush1.msra.mxu0 0.0
  %2248 = vmatprep.subr.mxu0 0.0
  %2249 = vmatpush1.msra.mxu0 0.0
  %2250 = vmatprep.subr.mxu0 0.0
  %2251 = vmatpush1.msra.mxu0 0.0
  %2252 = vmatprep.subr.mxu0 0.0
  %2253 = vmatpush1.msra.mxu0 0.0
  %2254 = vmatprep.subr.mxu0 0.0
  %2255 = vmatpush1.msra.mxu0 0.0
  %2256 = vmatprep.subr.mxu0 0.0
  %2257 = vmatpush1.msra.mxu0 0.0
  %2258 = vmatprep.subr.mxu0 0.0
  %2259 = vmatpush1.msra.mxu0 0.0
  %2260 = vmatprep.subr.mxu0 0.0
  %2261 = vmatpush1.msra.mxu0 0.0
  %2262 = vmatprep.subr.mxu0 0.0
  %2263 = vmatpush1.msra.mxu0 0.0
  %2264 = vmatprep.subr.mxu0 0.0
  %2265 = vmatpush1.msra.mxu0 0.0
  %2266 = vmatprep.subr.mxu0 0.0
  %2267 = vmatpush1.msra.mxu0 0.0
  %2268 = vmatprep.subr.mxu0 0.0
  %2269 = vmatpush1.msra.mxu0 0.0
  %2270 = vmatprep.subr.mxu0 0.0
  %2271 = vmatpush1.msra.mxu0 0.0
  %2272 = vmatprep.subr.mxu0 0.0
  %2273 = vmatpush1.msra.mxu0 0.0
  %2274 = vmatprep.subr.mxu0 0.0
  %2275 = vmatpush1.msra.mxu0 0.0
  %2276 = vmatprep.subr.mxu0 0.0
  %2277 = vmatpush1.msra.mxu0 0.0
  %2278 = vmatprep.subr.mxu0 0.0
  %2279 = vmatpush1.msra.mxu0 0.0
  %2280 = vmatprep.subr.mxu0 0.0
  %2281 = vmatpush1.msra.mxu0 0.0
  %2282 = vmatprep.subr.mxu0 0.0
  %2283 = vmatpush1.msra.mxu0 0.0
  %2284 = vmatprep.subr.mxu0 0.0
  %2285 = vmatpush1.msra.mxu0 0.0
  %2286 = vmatprep.subr.mxu0 0.0
  %2287 = vmatpush1.msra.mxu0 0.0
  %2288 = vmatprep.subr.mxu0 0.0
  %2289 = vmatpush1.msra.mxu0 0.0
  %2290 = vmatprep.subr.mxu0 0.0
  %2291 = vmatpush1.msra.mxu0 0.0
  %2292 = vmatprep.subr.mxu0 0.0
  %2293 = vmatpush1.msra.mxu0 0.0
  %2294 = vmatprep.subr.mxu0 0.0
  %2295 = vmatpush1.msra.mxu0 0.0
  %2296 = vmatprep.subr.mxu0 0.0
  %2297 = vmatpush1.msra.mxu0 0.0
  %2298 = vmatprep.subr.mxu0 0.0
  %2299 = vmatpush1.msra.mxu0 0.0
  %2300 = vmatprep.subr.mxu0 0.0
  %2301 = vmatpush1.msra.mxu0 0.0
  %2302 = vmatprep.mubr.f32.mxu0 0.0
  %2303 = vmatmul.mubr.f32.gmra.mrb[0].mxu0 %v2096
  %v2304 = vpop.f32.mrb[0].mxu0
  %v2305 = vadd.f32 %v598, %v2304
  %v2306 = vpop.f32.mrb[0].mxu0
  %2307 = vdwg.mxu0
  %v2308 = vadd.f32 %v227, %v2165
  %v2309 = vtanh.pop %v2308
  %v2310 = vmul.f32 %v2309, 0.5
  %v2311 = vadd.f32 %v2310, 0.5
  %v2312 = vadd.f32 %v336, %v2235
  %v2313 = vtanh.pop %v2312
  %v2314 = vmul.f32 %v2313, 0.5
  %v2315 = vadd.f32 %v2314, 0.5
  %v2316 = vmul.f32 %v2311, %v2305
  %v2317 = vadd.f32 %v445, %v2316
  %v2318 = vtanh.pop %v2317
  %v2319 = vsub.f32 %v2088, %v2318
  %v2320 = vmul.f32 %v2315, %v2319
  %v2321 = vadd.f32 %v2318, %v2320
  %vm2322 = vcmp.gt.s32.totalorder %v450, 7
  %v2323 = vsel %vm2322, %v2321, %v2088
  %v2324 = vsel %vm2322, %v2321, 0.0
  %2326 = vrot.lane.b32.xlu0 %v2324, 96
  %v2327 = vpop.permute.xlu0 %2326
  %2329 = vst.msk [vmem:[%s2 + $0x8] sm:$0xff] %vm1392, %v2327
  %2330 = vst.msk [vmem:[%s2 + $0x10] sm:$0xff] %vm451, %v2323
  // Predicated region
  $region10: #{_encoder_forward.1} parent=0 // pred_check
    _
  $region11: #{_encoder_forward.1} parent=0 // pred_check_branch
    %2332 = sbr.rel (0) target = $region13
  $region12: #{_encoder_forward.1} parent=0 // pred_region
    _
  $region13: #{_encoder_forward.1} parent=0 // pred_fallthru
    _
  // Predicated region
  $region14: #{_encoder_forward.1} parent=0 // pred_check
    _
  $region15: #{_encoder_forward.1} parent=0 // pred_check_branch
    %2334 = sbr.rel (0) target = $region17
  $region16: #{_encoder_forward.1} parent=0 // pred_region
    _
  $region17: #{_encoder_forward.1} parent=0 // pred_fallthru
    _

</llo_original>
